<compile_context>
chip_gen: v6e
topology: v6e:2x2x1
jax: 0.10.0
libtpu: 0.0.40
codegen_flags: <defaults>
</compile_context>

<pallas_src>
import jax
import jax.numpy as jnp
from jax import lax
from jax.experimental import pallas as pl
from jax.experimental.pallas import tpu as pltpu


def _pick_row_tile(h, target=8):
    """Largest divisor of h that is <= target (row-tile height)."""
    for th in range(min(h, target), 0, -1):
        if h % th == 0:
            return th
    return h


def _make_kernel(H, W, TH, Cin, Cmid, Cout, use_im2col):
    rows = TH + 2  # TH output rows + 1-row halo on each side

    def kernel(x_ref, w1_ref, w2_ref, w3_ref, b1_ref, b2_ref, b3_ref, o_ref):
        # x_ref:  (1, H+2, W, Cin)  whole padded image (bf16), resident per n
        # w1_ref: (Cin, Cmid)       bf16, BN1 scale folded
        # w2_ref: (9, Cmid, Cmid) or (9*Cmid, Cmid)  bf16, BN2 scale folded
        # w3_ref: (Cmid, Cout)      bf16, BN3 scale folded
        # b*_ref: (1, C)            f32 folded BN biases
        # o_ref:  (1, TH, W, Cout)  f32
        t = pl.program_id(1)
        r0 = t * TH                      # tile start row (padded coordinates)

        # ---- conv1 (1x1) + bias + ReLU over the TH+2 halo rows --------------
        xt = x_ref[0, pl.ds(r0, rows), :, :]                   # (rows, W, Cin)
        h1 = jnp.dot(xt.reshape(rows * W, Cin), w1_ref[...],
                     preferred_element_type=jnp.float32)
        h1 = jnp.maximum(h1 + b1_ref[...], 0.0).reshape(rows, W, Cmid)

        # conv2's zero padding applies to h1, not to x: halo rows that fall
        # outside the image come from the wrapper's zero-padded x rows and
        # would otherwise be relu(b1) != 0, so zero them explicitly.
        rid = lax.broadcasted_iota(jnp.int32, (rows, W, Cmid), 0) + (r0 - 1)
        h1 = jnp.where((rid >= 0) & (rid < H), h1, 0.0).astype(jnp.bfloat16)

        # ---- conv2 (3x3, pad=1, stride=1) + bias + ReLU ----------------------
        # Column zero-padding via a small concat; each (ky, kx) tap is a static
        # slice of the padded buffer (interpret-safe, no roll needed).
        zcol = jnp.zeros((rows, 1, Cmid), jnp.bfloat16)
        h1w = jnp.concatenate([zcol, h1, zcol], axis=1)        # (rows, W+2, Cmid)

        if use_im2col:
            taps = [h1w[ky:ky + TH, kx:kx + W, :]
                    for ky in range(3) for kx in range(3)]
            patches = jnp.concatenate(taps, axis=-1).reshape(TH * W, 9 * Cmid)
            h2 = jnp.dot(patches, w2_ref[...],
                         preferred_element_type=jnp.float32)
        else:
            h2 = jnp.zeros((TH * W, Cmid), jnp.float32)
            for ky in range(3):
                for kx in range(3):
                    tap = h1w[ky:ky + TH, kx:kx + W, :].reshape(TH * W, Cmid)
                    h2 = h2 + jnp.dot(tap, w2_ref[ky * 3 + kx],
                                      preferred_element_type=jnp.float32)
        h2 = jnp.maximum(h2 + b2_ref[...], 0.0)

        # ---- conv3 (1x1) + bias ---------------------------------------------
        h3 = jnp.dot(h2.astype(jnp.bfloat16), w3_ref[...],
                     preferred_element_type=jnp.float32)
        h3 = h3 + b3_ref[...]

        # ---- residual add (downsample=None => identity = x) + ReLU ----------
        identity = x_ref[0, pl.ds(r0 + 1, TH), :, :].reshape(TH * W, Cin)
        out = jnp.maximum(h3 + identity.astype(jnp.float32), 0.0)
        o_ref[0] = out.reshape(TH, W, Cout).astype(o_ref.dtype)

    return kernel


def bottleneck_forward(x_nchw, params, eps=1e-5, row_tile_target=8):
    """Runs the Bottleneck block. Input/output are NCHW (PyTorch convention)."""
    N, Cin, H, W = x_nchw.shape
    Cmid = params["w1"].shape[0]
    Cout = params["w3"].shape[0]
    assert Cout == Cin, "identity shortcut requires in_channels == 4*mid_channels"
    assert W % 8 == 0, "W must be a multiple of 8 (sublane tiling); pad W upstream"
    # TODO(synk): stride>1 / downsample!=None not supported (module defaults).

    TH = _pick_row_tile(H, row_tile_target)
    num_tiles = H // TH

    # NCHW -> NHWC, bf16 MXU operands, pad H by one zero row each side (halo).
    x = jnp.transpose(x_nchw, (0, 2, 3, 1)).astype(jnp.bfloat16)
    x = jnp.pad(x, ((0, 0), (1, 1), (0, 0), (0, 0)))

    def fold_bn(prefix):
        g = params[prefix + "_gamma"]
        b = params[prefix + "_beta"]
        m = params[prefix + "_mean"]
        v = params[prefix + "_var"]
        s = g / jnp.sqrt(v + eps)
        return s, b - m * s

    s1, b1 = fold_bn("bn1")
    s2, b2 = fold_bn("bn2")
    s3, b3 = fold_bn("bn3")

    # Fold BN scales into the conv weights in f32, then cast to bf16 so the
    # kernel epilogues are bias-add + ReLU only.
    w1 = (params["w1"][:, :, 0, 0].T * s1[None, :]).astype(jnp.bfloat16)   # (Cin, Cmid)
    w3 = (params["w3"][:, :, 0, 0].T * s3[None, :]).astype(jnp.bfloat16)   # (Cmid, Cout)
    w2 = jnp.transpose(params["w2"], (2, 3, 1, 0)) * s2[None, None, None, :]  # (kh,kw,Ci,Co)

    use_im2col = Cmid >= 128   # lane-concat im2col only pays off at full lane width
    if use_im2col:
        w2 = w2.reshape(9 * Cmid, Cmid).astype(jnp.bfloat16)
        w2_spec = pl.BlockSpec((9 * Cmid, Cmid), lambda n, t: (0, 0))
    else:
        w2 = w2.reshape(9, Cmid, Cmid).astype(jnp.bfloat16)
        w2_spec = pl.BlockSpec((9, Cmid, Cmid), lambda n, t: (0, 0, 0))

    b1 = b1[None, :].astype(jnp.float32)
    b2 = b2[None, :].astype(jnp.float32)
    b3 = b3[None, :].astype(jnp.float32)

    # Per-generation VMEM limit: ~3/4 of physical, capped at 100 MiB
    # (=> ~48 MiB on v7x, 96-100 MiB on v5e/v6e).
    try:
        cap = pltpu.get_tpu_info().vmem_capacity_bytes
        vmem_limit = int(min(cap * 3 // 4, 100 * 1024 * 1024))
    except Exception:
        vmem_limit = None
    cp_kwargs = dict(dimension_semantics=("parallel", "parallel"))
    if vmem_limit is not None:
        cp_kwargs["vmem_limit_bytes"] = vmem_limit

    flops = 2 * N * H * W * (Cin * Cmid + 9 * Cmid * Cmid + Cmid * Cout)
    bytes_accessed = (x.size * 2 + N * H * W * Cout * 4
                      + (w1.size + w2.size + w3.size) * 2
                      + (b1.size + b2.size + b3.size) * 4)
    cost = pl.CostEstimate(flops=int(flops), transcendentals=0,
                           bytes_accessed=int(bytes_accessed))

    kernel = _make_kernel(H, W, TH, Cin, Cmid, Cout, use_im2col)

    out_nhwc = pl.pallas_call(
        kernel,
        out_shape=jax.ShapeDtypeStruct((N, H, W, Cout), jnp.float32),
        grid=(N, num_tiles),
        in_specs=[
            pl.BlockSpec((1, H + 2, W, Cin), lambda n, t: (n, 0, 0, 0)),
            pl.BlockSpec((Cin, Cmid), lambda n, t: (0, 0)),
            w2_spec,
            pl.BlockSpec((Cmid, Cout), lambda n, t: (0, 0)),
            pl.BlockSpec((1, Cmid), lambda n, t: (0, 0)),
            pl.BlockSpec((1, Cmid), lambda n, t: (0, 0)),
            pl.BlockSpec((1, Cout), lambda n, t: (0, 0)),
        ],
        out_specs=pl.BlockSpec((1, TH, W, Cout), lambda n, t: (n, t, 0, 0)),
        compiler_params=pltpu.CompilerParams(**cp_kwargs),
        cost_estimate=cost,
    )(x, w1, w2, w3, b1, b2, b3)

    # NHWC -> NCHW to match the PyTorch module's output convention.
    return jnp.transpose(out_nhwc, (0, 3, 1, 2))


def reference_bottleneck(x, params, eps=1e-5):
    """Pure-JAX f32 reference (NCHW), mirrors the PyTorch forward (eval-mode BN)."""
    def conv(y, w, stride=1, pad=0):
        return jax.lax.conv_general_dilated(
            y, w, (stride, stride), [(pad, pad), (pad, pad)],
            dimension_numbers=("NCHW", "OIHW", "NCHW"))

    def bn(y, prefix):
        g = params[prefix + "_gamma"]
        b = params[prefix + "_beta"]
        m = params[prefix + "_mean"]
        v = params[prefix + "_var"]
        s = g / jnp.sqrt(v + eps)
        return y * s[None, :, None, None] + (b - m * s)[None, :, None, None]

    identity = x
    out = jax.nn.relu(bn(conv(x, params["w1"]), "bn1"))
    out = jax.nn.relu(bn(conv(out, params["w2"], stride=1, pad=1), "bn2"))
    out = bn(conv(out, params["w3"]), "bn3")
    return jax.nn.relu(out + identity)


def make_params(key, in_channels, mid_channels):
    expansion = 4
    out_channels = mid_channels * expansion
    ks = jax.random.split(key, 12)
    p = {
        "w1": 0.2 * jax.random.normal(ks[0], (mid_channels, in_channels, 1, 1), jnp.float32),
        "w2": 0.2 * jax.random.normal(ks[1], (mid_channels, mid_channels, 3, 3), jnp.float32),
        "w3": 0.2 * jax.random.normal(ks[2], (out_channels, mid_channels, 1, 1), jnp.float32),
    }
    for i, (prefix, c) in enumerate(
            [("bn1", mid_channels), ("bn2", mid_channels), ("bn3", out_channels)]):
        base = 3 + 3 * i
        p[prefix + "_gamma"] = jax.random.uniform(ks[base], (c,), jnp.float32, 0.5, 1.5)
        p[prefix + "_beta"] = 0.1 * jax.random.normal(ks[base + 1], (c,), jnp.float32)
        p[prefix + "_mean"] = 0.1 * jax.random.normal(ks[base + 2], (c,), jnp.float32)
        p[prefix + "_var"] = jax.random.uniform(ks[base], (c,), jnp.float32, 0.5, 1.5)
    return p


if __name__ == "__main__":
    key = jax.random.PRNGKey(0)
    k_x, k_p = jax.random.split(key)

    # Small shapes consistent with the module: in_channels = mid_channels * 4
    # so the identity shortcut is valid (stride=1, downsample=None).
    N, Cin, H, W = 2, 16, 16, 16
    Cmid = 4

    x = jax.random.normal(k_x, (N, Cin, H, W), jnp.float32)
    params = make_params(k_p, Cin, Cmid)

    out = jax.block_until_ready(bottleneck_forward(x, params))
    ref = jax.block_until_ready(reference_bottleneck(x, params))

    assert out.shape == (N, Cin, H, W)
    max_err = jnp.max(jnp.abs(out - ref))
    # Loosened tolerance: matmul operands / residual input are bf16 (f32 accumulation).
    assert jnp.allclose(out, ref, atol=5e-2, rtol=5e-2), f"max abs err = {max_err}"
    print("KERNEL_OK")
</pallas_src>

<mosaic_0001>
module attributes {stable_mosaic.version = 11 : i64} {
  func.func @kernel(%arg0: i32, %arg1: i32, %arg2: memref<1x18x16x16xbf16, #tpu.memory_space<vmem>>, %arg3: memref<16x4xbf16, #tpu.memory_space<vmem>>, %arg4: memref<9x4x4xbf16, #tpu.memory_space<vmem>>, %arg5: memref<4x16xbf16, #tpu.memory_space<vmem>>, %arg6: memref<1x4xf32, #tpu.memory_space<vmem>>, %arg7: memref<1x4xf32, #tpu.memory_space<vmem>>, %arg8: memref<1x16xf32, #tpu.memory_space<vmem>>, %arg9: memref<1x8x16x16xf32, #tpu.memory_space<vmem>>) attributes {dimension_semantics = [#tpu.dimension_semantics<parallel>, #tpu.dimension_semantics<parallel>], iteration_bounds = array<i64: 2, 2>, scalar_prefetch = 0 : i64, scratch_operands = 0 : i64, tpu.core_type = #tpu.core_type<tc>, window_params = [{transform_indices = @transform_0, window_bounds = array<i64: 1, 18, 16, 16>}, {pipeline_mode = #tpu.pipeline_mode<synchronous>, transform_indices = @transform_1, window_bounds = array<i64: 16, 4>}, {pipeline_mode = #tpu.pipeline_mode<synchronous>, transform_indices = @transform_2, window_bounds = array<i64: 9, 4, 4>}, {pipeline_mode = #tpu.pipeline_mode<synchronous>, transform_indices = @transform_3, window_bounds = array<i64: 4, 16>}, {pipeline_mode = #tpu.pipeline_mode<synchronous>, transform_indices = @transform_4, window_bounds = array<i64: 1, 4>}, {pipeline_mode = #tpu.pipeline_mode<synchronous>, transform_indices = @transform_5, window_bounds = array<i64: 1, 4>}, {pipeline_mode = #tpu.pipeline_mode<synchronous>, transform_indices = @transform_6, window_bounds = array<i64: 1, 16>}, {transform_indices = @transform_7, window_bounds = array<i64: 1, 8, 16, 16>}]} {
    %c8_i32 = arith.constant 8 : i32
    %0 = arith.muli %arg1, %c8_i32 : i32
    %c0 = arith.constant 0 : index
    %1 = arith.index_cast %0 : i32 to index
    %c0_0 = arith.constant 0 : index
    %c0_1 = arith.constant 0 : index
    %2 = vector.load %arg2[%c0, %1, %c0_0, %c0_1] : memref<1x18x16x16xbf16, #tpu.memory_space<vmem>>, vector<1x10x16x16xbf16>
    %3 = vector.shape_cast %2 : vector<1x10x16x16xbf16> to vector<10x16x16xbf16>
    %4 = vector.shape_cast %3 : vector<10x16x16xbf16> to vector<160x16xbf16>
    %c0_2 = arith.constant 0 : index
    %c0_3 = arith.constant 0 : index
    %5 = vector.load %arg3[%c0_2, %c0_3] : memref<16x4xbf16, #tpu.memory_space<vmem>>, vector<16x4xbf16>
    %cst = arith.constant dense<0.000000e+00> : vector<160x4xf32>
    %6 = tpu.matmul %4, %5, %cst {dimension_numbers = #tpu.dot_dimension_numbers<[1], [0], [0], [1], [0, 0, 1, 1], [], []>} : vector<160x16xbf16>, vector<16x4xbf16>, vector<160x4xf32> -> vector<160x4xf32>
    %c0_4 = arith.constant 0 : index
    %c0_5 = arith.constant 0 : index
    %7 = vector.load %arg6[%c0_4, %c0_5] : memref<1x4xf32, #tpu.memory_space<vmem>>, vector<1x4xf32>
    %8 = vector.broadcast %7 : vector<1x4xf32> to vector<160x4xf32>
    %9 = arith.addf %6, %8 : vector<160x4xf32>
    %cst_6 = arith.constant 0.000000e+00 : f32
    %10 = vector.broadcast %cst_6 : f32 to vector<160x4xf32>
    %11 = arith.maximumf %9, %10 : vector<160x4xf32>
    %12 = vector.shape_cast %11 : vector<160x4xf32> to vector<10x16x4xf32>
    %13 = tpu.iota {dimensions = array<i32: 0>} : vector<10x16x4xi32>
    %c1_i32 = arith.constant 1 : i32
    %14 = arith.subi %0, %c1_i32 : i32
    %15 = vector.broadcast %14 : i32 to vector<10x16x4xi32>
    %16 = arith.addi %13, %15 : vector<10x16x4xi32>
    %c0_i32 = arith.constant 0 : i32
    %17 = vector.broadcast %c0_i32 : i32 to vector<10x16x4xi32>
    %18 = arith.cmpi sge, %16, %17 : vector<10x16x4xi32>
    %c16_i32 = arith.constant 16 : i32
    %19 = vector.broadcast %c16_i32 : i32 to vector<10x16x4xi32>
    %20 = arith.cmpi slt, %16, %19 : vector<10x16x4xi32>
    %21 = arith.andi %18, %20 : vector<10x16x4xi1>
    %cst_7 = arith.constant 0.000000e+00 : f32
    %22 = vector.broadcast %cst_7 : f32 to vector<10x16x4xf32>
    %23 = arith.select %21, %12, %22 : vector<10x16x4xi1>, vector<10x16x4xf32>
    %24 = arith.truncf %23 : vector<10x16x4xf32> to vector<10x16x4xbf16>
    %cst_8 = arith.constant 0.000000e+00 : bf16
    %25 = vector.broadcast %cst_8 : bf16 to vector<10x1x4xbf16>
    %26 = tpu.concatenate %25, %24, %25 in 1 : vector<10x1x4xbf16>, vector<10x16x4xbf16>, vector<10x1x4xbf16> -> vector<10x18x4xbf16>
    %cst_9 = arith.constant 0.000000e+00 : f32
    %27 = vector.broadcast %cst_9 : f32 to vector<128x4xf32>
    %28 = vector.extract_strided_slice %26 {offsets = [0, 0, 0], sizes = [8, 16, 4], strides = [1, 1, 1]} : vector<10x18x4xbf16> to vector<8x16x4xbf16>
    %29 = vector.shape_cast %28 : vector<8x16x4xbf16> to vector<128x4xbf16>
    %c0_10 = arith.constant 0 : index
    %c0_11 = arith.constant 0 : index
    %c0_12 = arith.constant 0 : index
    %30 = vector.load %arg4[%c0_10, %c0_11, %c0_12] : memref<9x4x4xbf16, #tpu.memory_space<vmem>>, vector<1x4x4xbf16>
    %31 = vector.shape_cast %30 : vector<1x4x4xbf16> to vector<4x4xbf16>
    %cst_13 = arith.constant dense<0.000000e+00> : vector<128x4xf32>
    %32 = tpu.matmul %29, %31, %cst_13 {dimension_numbers = #tpu.dot_dimension_numbers<[1], [0], [0], [1], [0, 0, 1, 1], [], []>} : vector<128x4xbf16>, vector<4x4xbf16>, vector<128x4xf32> -> vector<128x4xf32>
    %33 = arith.addf %27, %32 : vector<128x4xf32>
    %34 = vector.extract_strided_slice %26 {offsets = [0, 1, 0], sizes = [8, 16, 4], strides = [1, 1, 1]} : vector<10x18x4xbf16> to vector<8x16x4xbf16>
    %35 = vector.shape_cast %34 : vector<8x16x4xbf16> to vector<128x4xbf16>
    %c1 = arith.constant 1 : index
    %c0_14 = arith.constant 0 : index
    %c0_15 = arith.constant 0 : index
    %36 = vector.load %arg4[%c1, %c0_14, %c0_15] : memref<9x4x4xbf16, #tpu.memory_space<vmem>>, vector<1x4x4xbf16>
    %37 = vector.shape_cast %36 : vector<1x4x4xbf16> to vector<4x4xbf16>
    %cst_16 = arith.constant dense<0.000000e+00> : vector<128x4xf32>
    %38 = tpu.matmul %35, %37, %cst_16 {dimension_numbers = #tpu.dot_dimension_numbers<[1], [0], [0], [1], [0, 0, 1, 1], [], []>} : vector<128x4xbf16>, vector<4x4xbf16>, vector<128x4xf32> -> vector<128x4xf32>
    %39 = arith.addf %33, %38 : vector<128x4xf32>
    %40 = vector.extract_strided_slice %26 {offsets = [0, 2, 0], sizes = [8, 16, 4], strides = [1, 1, 1]} : vector<10x18x4xbf16> to vector<8x16x4xbf16>
    %41 = vector.shape_cast %40 : vector<8x16x4xbf16> to vector<128x4xbf16>
    %c2 = arith.constant 2 : index
    %c0_17 = arith.constant 0 : index
    %c0_18 = arith.constant 0 : index
    %42 = vector.load %arg4[%c2, %c0_17, %c0_18] : memref<9x4x4xbf16, #tpu.memory_space<vmem>>, vector<1x4x4xbf16>
    %43 = vector.shape_cast %42 : vector<1x4x4xbf16> to vector<4x4xbf16>
    %cst_19 = arith.constant dense<0.000000e+00> : vector<128x4xf32>
    %44 = tpu.matmul %41, %43, %cst_19 {dimension_numbers = #tpu.dot_dimension_numbers<[1], [0], [0], [1], [0, 0, 1, 1], [], []>} : vector<128x4xbf16>, vector<4x4xbf16>, vector<128x4xf32> -> vector<128x4xf32>
    %45 = arith.addf %39, %44 : vector<128x4xf32>
    %46 = vector.extract_strided_slice %26 {offsets = [1, 0, 0], sizes = [8, 16, 4], strides = [1, 1, 1]} : vector<10x18x4xbf16> to vector<8x16x4xbf16>
    %47 = vector.shape_cast %46 : vector<8x16x4xbf16> to vector<128x4xbf16>
    %c3 = arith.constant 3 : index
    %c0_20 = arith.constant 0 : index
    %c0_21 = arith.constant 0 : index
    %48 = vector.load %arg4[%c3, %c0_20, %c0_21] : memref<9x4x4xbf16, #tpu.memory_space<vmem>>, vector<1x4x4xbf16>
    %49 = vector.shape_cast %48 : vector<1x4x4xbf16> to vector<4x4xbf16>
    %cst_22 = arith.constant dense<0.000000e+00> : vector<128x4xf32>
    %50 = tpu.matmul %47, %49, %cst_22 {dimension_numbers = #tpu.dot_dimension_numbers<[1], [0], [0], [1], [0, 0, 1, 1], [], []>} : vector<128x4xbf16>, vector<4x4xbf16>, vector<128x4xf32> -> vector<128x4xf32>
    %51 = arith.addf %45, %50 : vector<128x4xf32>
    %52 = vector.extract_strided_slice %26 {offsets = [1, 1, 0], sizes = [8, 16, 4], strides = [1, 1, 1]} : vector<10x18x4xbf16> to vector<8x16x4xbf16>
    %53 = vector.shape_cast %52 : vector<8x16x4xbf16> to vector<128x4xbf16>
    %c4 = arith.constant 4 : index
    %c0_23 = arith.constant 0 : index
    %c0_24 = arith.constant 0 : index
    %54 = vector.load %arg4[%c4, %c0_23, %c0_24] : memref<9x4x4xbf16, #tpu.memory_space<vmem>>, vector<1x4x4xbf16>
    %55 = vector.shape_cast %54 : vector<1x4x4xbf16> to vector<4x4xbf16>
    %cst_25 = arith.constant dense<0.000000e+00> : vector<128x4xf32>
    %56 = tpu.matmul %53, %55, %cst_25 {dimension_numbers = #tpu.dot_dimension_numbers<[1], [0], [0], [1], [0, 0, 1, 1], [], []>} : vector<128x4xbf16>, vector<4x4xbf16>, vector<128x4xf32> -> vector<128x4xf32>
    %57 = arith.addf %51, %56 : vector<128x4xf32>
    %58 = vector.extract_strided_slice %26 {offsets = [1, 2, 0], sizes = [8, 16, 4], strides = [1, 1, 1]} : vector<10x18x4xbf16> to vector<8x16x4xbf16>
    %59 = vector.shape_cast %58 : vector<8x16x4xbf16> to vector<128x4xbf16>
    %c5 = arith.constant 5 : index
    %c0_26 = arith.constant 0 : index
    %c0_27 = arith.constant 0 : index
    %60 = vector.load %arg4[%c5, %c0_26, %c0_27] : memref<9x4x4xbf16, #tpu.memory_space<vmem>>, vector<1x4x4xbf16>
    %61 = vector.shape_cast %60 : vector<1x4x4xbf16> to vector<4x4xbf16>
    %cst_28 = arith.constant dense<0.000000e+00> : vector<128x4xf32>
    %62 = tpu.matmul %59, %61, %cst_28 {dimension_numbers = #tpu.dot_dimension_numbers<[1], [0], [0], [1], [0, 0, 1, 1], [], []>} : vector<128x4xbf16>, vector<4x4xbf16>, vector<128x4xf32> -> vector<128x4xf32>
    %63 = arith.addf %57, %62 : vector<128x4xf32>
    %64 = vector.extract_strided_slice %26 {offsets = [2, 0, 0], sizes = [8, 16, 4], strides = [1, 1, 1]} : vector<10x18x4xbf16> to vector<8x16x4xbf16>
    %65 = vector.shape_cast %64 : vector<8x16x4xbf16> to vector<128x4xbf16>
    %c6 = arith.constant 6 : index
    %c0_29 = arith.constant 0 : index
    %c0_30 = arith.constant 0 : index
    %66 = vector.load %arg4[%c6, %c0_29, %c0_30] : memref<9x4x4xbf16, #tpu.memory_space<vmem>>, vector<1x4x4xbf16>
    %67 = vector.shape_cast %66 : vector<1x4x4xbf16> to vector<4x4xbf16>
    %cst_31 = arith.constant dense<0.000000e+00> : vector<128x4xf32>
    %68 = tpu.matmul %65, %67, %cst_31 {dimension_numbers = #tpu.dot_dimension_numbers<[1], [0], [0], [1], [0, 0, 1, 1], [], []>} : vector<128x4xbf16>, vector<4x4xbf16>, vector<128x4xf32> -> vector<128x4xf32>
    %69 = arith.addf %63, %68 : vector<128x4xf32>
    %70 = vector.extract_strided_slice %26 {offsets = [2, 1, 0], sizes = [8, 16, 4], strides = [1, 1, 1]} : vector<10x18x4xbf16> to vector<8x16x4xbf16>
    %71 = vector.shape_cast %70 : vector<8x16x4xbf16> to vector<128x4xbf16>
    %c7 = arith.constant 7 : index
    %c0_32 = arith.constant 0 : index
    %c0_33 = arith.constant 0 : index
    %72 = vector.load %arg4[%c7, %c0_32, %c0_33] : memref<9x4x4xbf16, #tpu.memory_space<vmem>>, vector<1x4x4xbf16>
    %73 = vector.shape_cast %72 : vector<1x4x4xbf16> to vector<4x4xbf16>
    %cst_34 = arith.constant dense<0.000000e+00> : vector<128x4xf32>
    %74 = tpu.matmul %71, %73, %cst_34 {dimension_numbers = #tpu.dot_dimension_numbers<[1], [0], [0], [1], [0, 0, 1, 1], [], []>} : vector<128x4xbf16>, vector<4x4xbf16>, vector<128x4xf32> -> vector<128x4xf32>
    %75 = arith.addf %69, %74 : vector<128x4xf32>
    %76 = vector.extract_strided_slice %26 {offsets = [2, 2, 0], sizes = [8, 16, 4], strides = [1, 1, 1]} : vector<10x18x4xbf16> to vector<8x16x4xbf16>
    %77 = vector.shape_cast %76 : vector<8x16x4xbf16> to vector<128x4xbf16>
    %c8 = arith.constant 8 : index
    %c0_35 = arith.constant 0 : index
    %c0_36 = arith.constant 0 : index
    %78 = vector.load %arg4[%c8, %c0_35, %c0_36] : memref<9x4x4xbf16, #tpu.memory_space<vmem>>, vector<1x4x4xbf16>
    %79 = vector.shape_cast %78 : vector<1x4x4xbf16> to vector<4x4xbf16>
    %cst_37 = arith.constant dense<0.000000e+00> : vector<128x4xf32>
    %80 = tpu.matmul %77, %79, %cst_37 {dimension_numbers = #tpu.dot_dimension_numbers<[1], [0], [0], [1], [0, 0, 1, 1], [], []>} : vector<128x4xbf16>, vector<4x4xbf16>, vector<128x4xf32> -> vector<128x4xf32>
    %81 = arith.addf %75, %80 : vector<128x4xf32>
    %c0_38 = arith.constant 0 : index
    %c0_39 = arith.constant 0 : index
    %82 = vector.load %arg7[%c0_38, %c0_39] : memref<1x4xf32, #tpu.memory_space<vmem>>, vector<1x4xf32>
    %83 = vector.broadcast %82 : vector<1x4xf32> to vector<128x4xf32>
    %84 = arith.addf %81, %83 : vector<128x4xf32>
    %cst_40 = arith.constant 0.000000e+00 : f32
    %85 = vector.broadcast %cst_40 : f32 to vector<128x4xf32>
    %86 = arith.maximumf %84, %85 : vector<128x4xf32>
    %87 = arith.truncf %86 : vector<128x4xf32> to vector<128x4xbf16>
    %c0_41 = arith.constant 0 : index
    %c0_42 = arith.constant 0 : index
    %88 = vector.load %arg5[%c0_41, %c0_42] : memref<4x16xbf16, #tpu.memory_space<vmem>>, vector<4x16xbf16>
    %cst_43 = arith.constant dense<0.000000e+00> : vector<128x16xf32>
    %89 = tpu.matmul %87, %88, %cst_43 {dimension_numbers = #tpu.dot_dimension_numbers<[1], [0], [0], [1], [0, 0, 1, 1], [], []>} : vector<128x4xbf16>, vector<4x16xbf16>, vector<128x16xf32> -> vector<128x16xf32>
    %c0_44 = arith.constant 0 : index
    %c0_45 = arith.constant 0 : index
    %90 = vector.load %arg8[%c0_44, %c0_45] : memref<1x16xf32, #tpu.memory_space<vmem>>, vector<1x16xf32>
    %91 = vector.broadcast %90 : vector<1x16xf32> to vector<128x16xf32>
    %92 = arith.addf %89, %91 : vector<128x16xf32>
    %c1_i32_46 = arith.constant 1 : i32
    %93 = arith.addi %0, %c1_i32_46 : i32
    %c0_47 = arith.constant 0 : index
    %94 = arith.index_cast %93 : i32 to index
    %c0_48 = arith.constant 0 : index
    %c0_49 = arith.constant 0 : index
    %95 = vector.load %arg2[%c0_47, %94, %c0_48, %c0_49] : memref<1x18x16x16xbf16, #tpu.memory_space<vmem>>, vector<1x8x16x16xbf16>
    %96 = vector.shape_cast %95 : vector<1x8x16x16xbf16> to vector<8x16x16xbf16>
    %97 = vector.shape_cast %96 : vector<8x16x16xbf16> to vector<128x16xbf16>
    %98 = arith.extf %97 : vector<128x16xbf16> to vector<128x16xf32>
    %99 = arith.addf %92, %98 : vector<128x16xf32>
    %cst_50 = arith.constant 0.000000e+00 : f32
    %100 = vector.broadcast %cst_50 : f32 to vector<128x16xf32>
    %101 = arith.maximumf %99, %100 : vector<128x16xf32>
    %102 = vector.shape_cast %101 : vector<128x16xf32> to vector<8x16x16xf32>
    %c0_51 = arith.constant 0 : index
    %c0_52 = arith.constant 0 : index
    %c0_53 = arith.constant 0 : index
    %c0_54 = arith.constant 0 : index
    %103 = vector.load %arg9[%c0_51, %c0_52, %c0_53, %c0_54] : memref<1x8x16x16xf32, #tpu.memory_space<vmem>>, vector<1x8x16x16xf32>
    %104 = vector.shape_cast %103 : vector<1x8x16x16xf32> to vector<8x16x16xf32>
    %105 = vector.shape_cast %102 : vector<8x16x16xf32> to vector<1x8x16x16xf32>
    tpu.vector_store %arg9[%c0_51, %c0_52, %c0_53, %c0_54], %105 {strides = array<i32>} : memref<1x8x16x16xf32, #tpu.memory_space<vmem>>, vector<1x8x16x16xf32>,
    return
  }
  func.func @transform_0(%arg0: i32, %arg1: i32) -> (i32, i32, i32, i32) {
    %c0_i32 = arith.constant 0 : i32
    %c0_i32_0 = arith.constant 0 : i32
    %c0_i32_1 = arith.constant 0 : i32
    %c0_i32_2 = arith.constant 0 : i32
    return %arg0, %c0_i32, %c0_i32_0, %c0_i32_1 : i32, i32, i32, i32
  }
  func.func @transform_1(%arg0: i32, %arg1: i32) -> (i32, i32) {
    %c0_i32 = arith.constant 0 : i32
    %c0_i32_0 = arith.constant 0 : i32
    %c0_i32_1 = arith.constant 0 : i32
    return %c0_i32, %c0_i32_0 : i32, i32
  }
  func.func @transform_2(%arg0: i32, %arg1: i32) -> (i32, i32, i32) {
    %c0_i32 = arith.constant 0 : i32
    %c0_i32_0 = arith.constant 0 : i32
    %c0_i32_1 = arith.constant 0 : i32
    %c0_i32_2 = arith.constant 0 : i32
    return %c0_i32, %c0_i32_0, %c0_i32_1 : i32, i32, i32
  }
  func.func @transform_3(%arg0: i32, %arg1: i32) -> (i32, i32) {
    %c0_i32 = arith.constant 0 : i32
    %c0_i32_0 = arith.constant 0 : i32
    %c0_i32_1 = arith.constant 0 : i32
    return %c0_i32, %c0_i32_0 : i32, i32
  }
  func.func @transform_4(%arg0: i32, %arg1: i32) -> (i32, i32) {
    %c0_i32 = arith.constant 0 : i32
    %c0_i32_0 = arith.constant 0 : i32
    %c0_i32_1 = arith.constant 0 : i32
    return %c0_i32, %c0_i32_0 : i32, i32
  }
  func.func @transform_5(%arg0: i32, %arg1: i32) -> (i32, i32) {
    %c0_i32 = arith.constant 0 : i32
    %c0_i32_0 = arith.constant 0 : i32
    %c0_i32_1 = arith.constant 0 : i32
    return %c0_i32, %c0_i32_0 : i32, i32
  }
  func.func @transform_6(%arg0: i32, %arg1: i32) -> (i32, i32) {
    %c0_i32 = arith.constant 0 : i32
    %c0_i32_0 = arith.constant 0 : i32
    %c0_i32_1 = arith.constant 0 : i32
    return %c0_i32, %c0_i32_0 : i32, i32
  }
  func.func @transform_7(%arg0: i32, %arg1: i32) -> (i32, i32, i32, i32) {
    %c0_i32 = arith.constant 0 : i32
    %c0_i32_0 = arith.constant 0 : i32
    %c0_i32_1 = arith.constant 0 : i32
    return %arg0, %arg1, %c0_i32, %c0_i32_0 : i32, i32, i32, i32
  }
}

</mosaic_0001>

<llo_original>
// kernel: tpu_custom_call.1
$region0: #{tpu_custom_call.1}
  #allocation0 [shape = 'u32[]', space=smem, size = 0x4, offset = 0x4, fixed_abs, tag = 'smem constant byte address 0x4 - core index']
  #allocation1 [shape = 'u32[144,128]{1,0:T(1,128)}', space=vmem, size = 0x12000, scoped, tag = 'internal scratch']
  %s0 = inlined_call_operand.vmem [shape: bf16[2,18,16,16], index: 0, kind: input, shape index: {}]
  %s1 = inlined_call_operand.vmem [shape: bf16[16,4], index: 1, kind: input, shape index: {}]
  %s2 = inlined_call_operand.vmem [shape: bf16[9,4,4], index: 2, kind: input, shape index: {}]
  %s3 = inlined_call_operand.vmem [shape: bf16[4,16], index: 3, kind: input, shape index: {}]
  %s4 = inlined_call_operand.vmem [shape: f32[1,4], index: 4, kind: input, shape index: {}]
  %s5 = inlined_call_operand.vmem [shape: f32[1,4], index: 5, kind: input, shape index: {}]
  %s6 = inlined_call_operand.vmem [shape: f32[1,16], index: 6, kind: input, shape index: {}]
  %s7 = inlined_call_operand.hbm [shape: f32[2,16,16,16], index: 7, kind: output, shape index: {}]
  %s8 = sld [smem:[#allocation0]]
  $region61: #{tpu_custom_call.1} parent=0
    _
  %s10 = ssub.s32 1, %s8
  %s11 = scalar_select 0, %s10, %s8
  $region1: #{tpu_custom_call.1} parent=0
    #allocation2 [shape = 'u8[131072]{0}', space=vmem, size = 0x20000, scoped, tag = 'output window, operand 0']
    #allocation3 [shape = 's32[2]{0}', space=sflag, size = 0x8, scoped, tag = 'scoped memory for tpu_custom_call.1']
    %12 = vsyncpa [#allocation3], 0
    %s13 = scalar_lea.sflag [#allocation3], 1
    %14 = vsyncpa %s13, 0
    loop: start=0, step=1, limit=6
    $region2: #{tpu_custom_call.1} parent=1 // loop_pre_header
      _
    $region3: #{tpu_custom_call.1} parent=1 // loop_header
      %s16 = sphi 0, %s20
      %p17 = scmp.ge.s32.totalorder %s16, 6
      %s23 = sphi 0, %s35
      %s24 = sphi 0, %s31
      %s25 = sphi 0, %s23
      %s26 = sphi 0, %s24
      %s27 = sphi 0, %s25
      %s28 = sphi 0, %s26
      %s38 = sphi 0, %s40
      %s41 = sphi 0, %s38
      %s42 = sphi 0, %s41
      %s58 = sphi 0, %s42
      %s62 = sphi 0, %s62
      %s64 = sphi 0, %s62
      %s65 = sphi 0, %s64
      %s79 = sphi 0, %s65
      %s83 = sphi 0, %s83
      %s85 = sphi 0, %s83
      %s86 = sphi 0, %s85
      %s100 = sphi 0, %s86
      %s104 = sphi 0, %s104
      %s106 = sphi 0, %s104
      %s107 = sphi 0, %s106
      %s121 = sphi 0, %s107
      %s125 = sphi 0, %s125
      %s127 = sphi 0, %s125
      %s128 = sphi 0, %s127
      %s142 = sphi 0, %s128
      %s146 = sphi 0, %s146
      %s148 = sphi 0, %s146
      %s149 = sphi 0, %s148
      %s163 = sphi 0, %s149
      %s167 = sphi 0, %s167
      %s169 = sphi 0, %s167
      %s170 = sphi 0, %s169
      %s184 = sphi 0, %s170
      %s192 = sphi 0, %s194
      %s195 = sphi 0, %s192
      %s196 = sphi 0, %s195
      %s212 = sphi 0, %s196
    $region4: #{tpu_custom_call.1} parent=1 // loop_header_branch
      %19 = sbr.rel (%p17) target = $region8
    $region5: #{tpu_custom_call.1} parent=1 // loop_body
      %s21 = ssub.s32 %s16, 1
      %s22 = ssub.s32 %s16, 2
      %s29 = sadd.s32 1, %s24
      %p30 = scmp.ge.s32.totalorder %s29, 2
      %s31 = scalar_select %p30, 0, %s29
      %s32 = sadd.s32 1, %s23
      %s33 = scalar_select %p30, %s32, %s23
      %p34 = scmp.ge.s32.totalorder %s33, 2
      %s35 = scalar_select %p34, 0, %s33
      %s36 = ssub.s32 %s23, %s35
      %p37 = scmp.eq.s32.totalorder %s36, 0
      %s39 = sadd.s32 %s38, 1
      %s40 = scalar_select %p37, %s38, %s39
      %p43 = pneg %p37
      %p44 = scmp.eq.s32.totalorder %s16, 3
      %p45 = por %p43, %p44
      %p46 = scmp.ne.s32.totalorder %s38, %s41
      %p47 = scmp.eq.s32.totalorder %s16, 0
      %p48 = por %p46, %p47
      %p49 = scmp.ne.s32.totalorder %s38, %s41
      %p50 = scmp.eq.s32.totalorder %s21, 3
      %p51 = por %p49, %p50
      %p52 = scmp.ne.s32.totalorder %s41, %s42
      %p53 = scmp.eq.s32.totalorder %s21, 0
      %p54 = por %p52, %p53
      %p55 = scmp.ne.s32.totalorder %s41, %s42
      %p56 = scmp.eq.s32.totalorder %s22, 3
      %p57 = por %p55, %p56
      %p59 = scmp.ne.s32.totalorder %s42, %s58
      %p60 = scmp.eq.s32.totalorder %s22, 0
      %p61 = por %p59, %p60
      %s63 = sadd.s32 %s62, 1
      %p66 = scmp.eq.s32.totalorder %s16, 3
      %p67 = scmp.ne.s32.totalorder %s62, %s64
      %p68 = scmp.eq.s32.totalorder %s16, 0
      %p69 = por %p67, %p68
      %p70 = scmp.ne.s32.totalorder %s62, %s64
      %p71 = scmp.eq.s32.totalorder %s21, 3
      %p72 = por %p70, %p71
      %p73 = scmp.ne.s32.totalorder %s64, %s65
      %p74 = scmp.eq.s32.totalorder %s21, 0
      %p75 = por %p73, %p74
      %p76 = scmp.ne.s32.totalorder %s64, %s65
      %p77 = scmp.eq.s32.totalorder %s22, 3
      %p78 = por %p76, %p77
      %p80 = scmp.ne.s32.totalorder %s65, %s79
      %p81 = scmp.eq.s32.totalorder %s22, 0
      %p82 = por %p80, %p81
      %s84 = sadd.s32 %s83, 1
      %p87 = scmp.eq.s32.totalorder %s16, 3
      %p88 = scmp.ne.s32.totalorder %s83, %s85
      %p89 = scmp.eq.s32.totalorder %s16, 0
      %p90 = por %p88, %p89
      %p91 = scmp.ne.s32.totalorder %s83, %s85
      %p92 = scmp.eq.s32.totalorder %s21, 3
      %p93 = por %p91, %p92
      %p94 = scmp.ne.s32.totalorder %s85, %s86
      %p95 = scmp.eq.s32.totalorder %s21, 0
      %p96 = por %p94, %p95
      %p97 = scmp.ne.s32.totalorder %s85, %s86
      %p98 = scmp.eq.s32.totalorder %s22, 3
      %p99 = por %p97, %p98
      %p101 = scmp.ne.s32.totalorder %s86, %s100
      %p102 = scmp.eq.s32.totalorder %s22, 0
      %p103 = por %p101, %p102
      %s105 = sadd.s32 %s104, 1
      %p108 = scmp.eq.s32.totalorder %s16, 3
      %p109 = scmp.ne.s32.totalorder %s104, %s106
      %p110 = scmp.eq.s32.totalorder %s16, 0
      %p111 = por %p109, %p110
      %p112 = scmp.ne.s32.totalorder %s104, %s106
      %p113 = scmp.eq.s32.totalorder %s21, 3
      %p114 = por %p112, %p113
      %p115 = scmp.ne.s32.totalorder %s106, %s107
      %p116 = scmp.eq.s32.totalorder %s21, 0
      %p117 = por %p115, %p116
      %p118 = scmp.ne.s32.totalorder %s106, %s107
      %p119 = scmp.eq.s32.totalorder %s22, 3
      %p120 = por %p118, %p119
      %p122 = scmp.ne.s32.totalorder %s107, %s121
      %p123 = scmp.eq.s32.totalorder %s22, 0
      %p124 = por %p122, %p123
      %s126 = sadd.s32 %s125, 1
      %p129 = scmp.eq.s32.totalorder %s16, 3
      %p130 = scmp.ne.s32.totalorder %s125, %s127
      %p131 = scmp.eq.s32.totalorder %s16, 0
      %p132 = por %p130, %p131
      %p133 = scmp.ne.s32.totalorder %s125, %s127
      %p134 = scmp.eq.s32.totalorder %s21, 3
      %p135 = por %p133, %p134
      %p136 = scmp.ne.s32.totalorder %s127, %s128
      %p137 = scmp.eq.s32.totalorder %s21, 0
      %p138 = por %p136, %p137
      %p139 = scmp.ne.s32.totalorder %s127, %s128
      %p140 = scmp.eq.s32.totalorder %s22, 3
      %p141 = por %p139, %p140
      %p143 = scmp.ne.s32.totalorder %s128, %s142
      %p144 = scmp.eq.s32.totalorder %s22, 0
      %p145 = por %p143, %p144
      %s147 = sadd.s32 %s146, 1
      %p150 = scmp.eq.s32.totalorder %s16, 3
      %p151 = scmp.ne.s32.totalorder %s146, %s148
      %p152 = scmp.eq.s32.totalorder %s16, 0
      %p153 = por %p151, %p152
      %p154 = scmp.ne.s32.totalorder %s146, %s148
      %p155 = scmp.eq.s32.totalorder %s21, 3
      %p156 = por %p154, %p155
      %p157 = scmp.ne.s32.totalorder %s148, %s149
      %p158 = scmp.eq.s32.totalorder %s21, 0
      %p159 = por %p157, %p158
      %p160 = scmp.ne.s32.totalorder %s148, %s149
      %p161 = scmp.eq.s32.totalorder %s22, 3
      %p162 = por %p160, %p161
      %p164 = scmp.ne.s32.totalorder %s149, %s163
      %p165 = scmp.eq.s32.totalorder %s22, 0
      %p166 = por %p164, %p165
      %s168 = sadd.s32 %s167, 1
      %p171 = scmp.eq.s32.totalorder %s16, 3
      %p172 = scmp.ne.s32.totalorder %s167, %s169
      %p173 = scmp.eq.s32.totalorder %s16, 0
      %p174 = por %p172, %p173
      %p175 = scmp.ne.s32.totalorder %s167, %s169
      %p176 = scmp.eq.s32.totalorder %s21, 3
      %p177 = por %p175, %p176
      %p178 = scmp.ne.s32.totalorder %s169, %s170
      %p179 = scmp.eq.s32.totalorder %s21, 0
      %p180 = por %p178, %p179
      %p181 = scmp.ne.s32.totalorder %s169, %s170
      %p182 = scmp.eq.s32.totalorder %s22, 3
      %p183 = por %p181, %p182
      %p185 = scmp.ne.s32.totalorder %s170, %s184
      %p186 = scmp.eq.s32.totalorder %s22, 0
      %p187 = por %p185, %p186
      %s188 = ssub.s32 %s23, %s35
      %s189 = ssub.s32 %s24, %s31
      %s190 = sor.u32 %s188, %s189
      %p191 = scmp.eq.s32.totalorder %s190, 0
      %s193 = sadd.s32 %s192, 1
      %s194 = scalar_select %p191, %s192, %s193
      %p197 = pneg %p191
      %p198 = scmp.eq.s32.totalorder %s16, 3
      %p199 = por %p197, %p198
      %p200 = scmp.ne.s32.totalorder %s192, %s195
      %p201 = scmp.eq.s32.totalorder %s16, 0
      %p202 = por %p200, %p201
      %p203 = scmp.ne.s32.totalorder %s192, %s195
      %p204 = scmp.eq.s32.totalorder %s21, 3
      %p205 = por %p203, %p204
      %p206 = scmp.ne.s32.totalorder %s195, %s196
      %p207 = scmp.eq.s32.totalorder %s21, 0
      %p208 = por %p206, %p207
      %p209 = scmp.ne.s32.totalorder %s195, %s196
      %p210 = scmp.eq.s32.totalorder %s22, 3
      %p211 = por %p209, %p210
      %p213 = scmp.ne.s32.totalorder %s196, %s212
      %p214 = scmp.eq.s32.totalorder %s22, 0
      %p215 = por %p213, %p214
      %p216 = scmp.le.s32.totalorder 1, %s16
      %p217 = scmp.lt.s32.totalorder %s16, 5
      %p218 = pnand %p216, %p217
      %p219 = pneg %p218
      // Predicated region
      $region9: #{tpu_custom_call.1} parent=5 // pred_check
        _
      $region10: #{tpu_custom_call.1} parent=5 // pred_check_branch
        %221 = sbr.rel (%p218) target = $region12
      $region11: #{tpu_custom_call.1} parent=5 // pred_region
        %s222 = ssub.s32 %s16, 1
        // Predicated region
        $region13: #{tpu_custom_call.1} parent=11 // pred_check
          %p223 = pneg %p75
        $region14: #{tpu_custom_call.1} parent=11 // pred_check_branch
          %225 = sbr.rel (%p223) target = $region16
        $region15: #{tpu_custom_call.1} parent=11 // pred_region
          _
        $region16: #{tpu_custom_call.1} parent=11 // pred_fallthru
          _
        // Predicated region
        $region17: #{tpu_custom_call.1} parent=11 // pred_check
          %p226 = pneg %p96
        $region18: #{tpu_custom_call.1} parent=11 // pred_check_branch
          %228 = sbr.rel (%p226) target = $region20
        $region19: #{tpu_custom_call.1} parent=11 // pred_region
          _
        $region20: #{tpu_custom_call.1} parent=11 // pred_fallthru
          _
        // Predicated region
        $region21: #{tpu_custom_call.1} parent=11 // pred_check
          %p229 = pneg %p117
        $region22: #{tpu_custom_call.1} parent=11 // pred_check_branch
          %231 = sbr.rel (%p229) target = $region24
        $region23: #{tpu_custom_call.1} parent=11 // pred_region
          _
        $region24: #{tpu_custom_call.1} parent=11 // pred_fallthru
          _
        // Predicated region
        $region25: #{tpu_custom_call.1} parent=11 // pred_check
          %p232 = pneg %p138
        $region26: #{tpu_custom_call.1} parent=11 // pred_check_branch
          %234 = sbr.rel (%p232) target = $region28
        $region27: #{tpu_custom_call.1} parent=11 // pred_region
          _
        $region28: #{tpu_custom_call.1} parent=11 // pred_fallthru
          _
        // Predicated region
        $region29: #{tpu_custom_call.1} parent=11 // pred_check
          %p235 = pneg %p159
        $region30: #{tpu_custom_call.1} parent=11 // pred_check_branch
          %237 = sbr.rel (%p235) target = $region32
        $region31: #{tpu_custom_call.1} parent=11 // pred_region
          _
        $region32: #{tpu_custom_call.1} parent=11 // pred_fallthru
          _
        // Predicated region
        $region33: #{tpu_custom_call.1} parent=11 // pred_check
          %p238 = pneg %p180
        $region34: #{tpu_custom_call.1} parent=11 // pred_check_branch
          %240 = sbr.rel (%p238) target = $region36
        $region35: #{tpu_custom_call.1} parent=11 // pred_region
          _
        $region36: #{tpu_custom_call.1} parent=11 // pred_fallthru
          _
      $region12: #{tpu_custom_call.1} parent=5 // pred_fallthru
        _
      %p241 = scmp.lt.s32.totalorder %s16, 4
      // Predicated region
      $region37: #{tpu_custom_call.1} parent=5 // pred_check
        %p242 = pneg %p241
      $region38: #{tpu_custom_call.1} parent=5 // pred_check_branch
        %244 = sbr.rel (%p242) target = $region40
      $region39: #{tpu_custom_call.1} parent=5 // pred_region
        // Predicated region
        $region41: #{tpu_custom_call.1} parent=39 // pred_check
          %p245 = pneg %p48
        $region42: #{tpu_custom_call.1} parent=39 // pred_check_branch
          %247 = sbr.rel (%p245) target = $region44
        $region43: #{tpu_custom_call.1} parent=39 // pred_region
          %p248 = scmp.lt.s32.totalorder %s23, 1
          %s249 = scalar_select %p248, %s23, 1
          %s250 = smul.addr %s249, 36
          %s251 = smul.addr %s250, 4
          %s252 = scalar_lea.vmem %s0, %s251
        $region44: #{tpu_custom_call.1} parent=39 // pred_fallthru
          _
      $region40: #{tpu_custom_call.1} parent=5 // pred_fallthru
        _
      %p253 = scmp.le.s32.totalorder 1, %s16
      %p254 = scmp.lt.s32.totalorder %s16, 5
      %p255 = pnand %p253, %p254
      %p256 = pneg %p255
      // Predicated region
      $region45: #{tpu_custom_call.1} parent=5 // pred_check
        _
      $region46: #{tpu_custom_call.1} parent=5 // pred_check_branch
        %258 = sbr.rel (%p255) target = $region48
      $region47: #{tpu_custom_call.1} parent=5 // pred_region
        %s259 = ssub.s32 %s16, 1
        %p260 = scmp.lt.s32.totalorder %s25, 1
        %s261 = scalar_select %p260, %s25, 1
        %s262 = smul.addr %s261, 36
        %s263 = smul.addr %s262, 4
        %s264 = scalar_lea.vmem %s0, %s263
        %p265 = pneg %p54
        %p266 = pneg %p51
        %p267 = pneg %p75
        %p268 = pneg %p72
        %p269 = pneg %p96
        %p270 = pneg %p93
        %p271 = pneg %p117
        %p272 = pneg %p114
        %p273 = pneg %p138
        %p274 = pneg %p135
        %p275 = pneg %p159
        %p276 = pneg %p156
        %p277 = pneg %p180
        %p278 = pneg %p177
        %p279 = pneg %p208
        %p280 = pneg %p205
        %s281 = sand.u32 %s195, 1
        %s282 = scalar_lea.sflag [#allocation3], %s281
        %s283 = sand.u32 %s195, 1
        %s284 = smul.addr %s283, 128
        %s285 = scalar_lea.vmem [#allocation2], %s284
        %p286 = scmp.lt.s32.totalorder %s25, 1
        %s287 = scalar_select %p286, %s25, 1
        %s288 = smul.addr %s287, 36
        %s289 = smul.addr %s288, 4
        %s290 = scalar_lea.vmem %s0, %s289
        %s291 = smul.u32 8, %s26
        %s293 = smul.u32 %s26, 8
        %s294 = smul.u32 %s293, 2
        %s295 = smul.addr %s294, 4
        %s296 = scalar_lea.vmem %s290, %s295
        %v297 = vld [vmem:[%s296] sm:$0xf]
        %v298 = vld [vmem:[%s296 + $0x4] sm:$0xf]
        %v299 = vld [vmem:[%s296 + $0x8] sm:$0xf]
        %v300 = vld [vmem:[%s296 + $0xc] sm:$0xf]
        %v301 = vld [vmem:[%s296 + $0x10] sm:$0xf]
        %v302 = vld [vmem:[%s296 + $0x14] sm:$0xf]
        %v303 = vld [vmem:[%s296 + $0x18] sm:$0xf]
        %v304 = vld [vmem:[%s296 + $0x1c] sm:$0xf]
        %v305 = vld [vmem:[%s296 + $0x20] sm:$0xf]
        %v306 = vld [vmem:[%s296 + $0x24] sm:$0xf]
        %v307 = vld [vmem:[%s296 + $0x28] sm:$0xf]
        %v308 = vld [vmem:[%s296 + $0x2c] sm:$0xf]
        %v309 = vld [vmem:[%s296 + $0x30] sm:$0xf]
        %v310 = vld [vmem:[%s296 + $0x34] sm:$0xf]
        %v311 = vld [vmem:[%s296 + $0x38] sm:$0xf]
        %v312 = vld [vmem:[%s296 + $0x3c] sm:$0xf]
        %v313 = vld [vmem:[%s296 + $0x40] sm:$0xf]
        %v314 = vld [vmem:[%s296 + $0x44] sm:$0xf]
        %v315 = vld [vmem:[%s296 + $0x48] sm:$0xf]
        %v316 = vld [vmem:[%s296 + $0x4c] sm:$0xf]
        %v317 = vld [vmem:[%s1] sm:$0xf]
        %v318 = vld [vmem:[%s1 + $0x4] sm:$0xf]
        %v319 = vld [vmem:[%s4] sm:$0x1]
        %v321 = vlaneseq
        %v322 = vshrl.u32 %v321, 7
        %v323 = vsub.s32 0, %v322
        %v324 = vrot.slane %v319, %v323
        %v346 = vunpack.c.l.b16 %v297
        %v347 = vunpack.c.l.b16 %v298
        %v348 = vunpack.c.l.b16 %v299
        %v349 = vunpack.c.l.b16 %v300
        %v350 = vunpack.c.l.b16 %v301
        %v351 = vunpack.c.l.b16 %v302
        %v352 = vunpack.c.l.b16 %v303
        %v353 = vunpack.c.l.b16 %v304
        %v354 = vunpack.c.l.b16 %v305
        %v355 = vunpack.c.l.b16 %v306
        %v356 = vunpack.c.l.b16 %v307
        %v357 = vunpack.c.l.b16 %v308
        %v358 = vunpack.c.l.b16 %v309
        %v359 = vunpack.c.l.b16 %v310
        %v360 = vunpack.c.l.b16 %v311
        %v361 = vunpack.c.l.b16 %v312
        %v362 = vunpack.c.l.b16 %v313
        %v363 = vunpack.c.l.b16 %v314
        %v364 = vunpack.c.l.b16 %v315
        %v365 = vunpack.c.l.b16 %v316
        %v366 = vpack.c.b16 %v347, %v346
        %v367 = vpack.c.b16 %v349, %v348
        %v368 = vpack.c.b16 %v351, %v350
        %v369 = vpack.c.b16 %v353, %v352
        %v370 = vpack.c.b16 %v355, %v354
        %v371 = vpack.c.b16 %v357, %v356
        %v372 = vpack.c.b16 %v359, %v358
        %v373 = vpack.c.b16 %v361, %v360
        %v374 = vpack.c.b16 %v363, %v362
        %v375 = vpack.c.b16 %v365, %v364
        %v378 = vunpack.c.l.b16 %v317
        %v379 = vunpack.c.l.b16 %v318
        %v380 = vpack.c.b16 %v379, %v378
        %vm382 = vcmask 130048
        %v384 = vsel %vm382, %v366, 0
        %v387 = vsel %vm382, %v367, 0
        %v390 = vsel %vm382, %v368, 0
        %v393 = vsel %vm382, %v369, 0
        %v396 = vsel %vm382, %v370, 0
        %v399 = vsel %vm382, %v371, 0
        %v402 = vsel %vm382, %v372, 0
        %v405 = vsel %vm382, %v373, 0
        %v408 = vsel %vm382, %v374, 0
        %v411 = vsel %vm382, %v375, 0
        %413 = vmatprep.subr.bf16.mxu0 0
        %414 = vmatpush1.bf16.msra.mxu0 0
        %415 = vmatprep.subr.bf16.mxu0 0
        %416 = vmatpush1.bf16.msra.mxu0 0
        %417 = vmatprep.subr.bf16.mxu0 0
        %418 = vmatpush1.bf16.msra.mxu0 0
        %419 = vmatprep.subr.bf16.mxu0 0
        %420 = vmatpush1.bf16.msra.mxu0 0
        %421 = vmatprep.subr.bf16.mxu0 0
        %422 = vmatpush1.bf16.msra.mxu0 0
        %423 = vmatprep.subr.bf16.mxu0 0
        %424 = vmatpush1.bf16.msra.mxu0 0
        %425 = vmatprep.subr.bf16.mxu0 0
        %426 = vmatpush1.bf16.msra.mxu0 0
        %427 = vmatprep.subr.bf16.mxu0 0
        %428 = vmatpush1.bf16.msra.mxu0 %v380
        %429 = vmatprep.subr.bf16.mxu0 0
        %430 = vmatpush2.bf16.msra.mxu0 0
        %431 = vmatprep.subr.bf16.mxu0 0
        %432 = vmatpush2.bf16.msra.mxu0 0
        %433 = vmatprep.subr.bf16.mxu0 0
        %434 = vmatpush2.bf16.msra.mxu0 0
        %435 = vmatprep.subr.bf16.mxu0 0
        %436 = vmatpush2.bf16.msra.mxu0 0
        %437 = vmatprep.subr.bf16.mxu0 0
        %438 = vmatpush2.bf16.msra.mxu0 0
        %439 = vmatprep.subr.bf16.mxu0 0
        %440 = vmatpush2.bf16.msra.mxu0 0
        %441 = vmatprep.subr.bf16.mxu0 0
        %442 = vmatpush2.bf16.msra.mxu0 0
        %443 = vmatprep.subr.bf16.mxu0 0
        %444 = vmatpush2.bf16.msra.mxu0 0
        %445 = vmatprep.mubr.bf16.mxu0 0
        %446 = vmatmul.mubr.bf16.gmra.mxu0 %v384
        %v447 = vpop.f32.mrf.mxu0
        %v448 = vadd.f32 %v324, %v447
        %v449 = vpop.f32.mrf.mxu0
        %v450 = vpop.f32.mrf.mxu0
        %v451 = vadd.f32 %v324, %v450
        %v452 = vpop.f32.mrf.mxu0
        %453 = vmatprep.mubr.bf16.mxu0 0
        %454 = vmatmul.mubr.bf16.gmra.mxu0 %v387
        %v455 = vpop.f32.mrf.mxu0
        %v456 = vadd.f32 %v324, %v455
        %v457 = vpop.f32.mrf.mxu0
        %v458 = vpop.f32.mrf.mxu0
        %v459 = vadd.f32 %v324, %v458
        %v460 = vpop.f32.mrf.mxu0
        %461 = vmatprep.mubr.bf16.mxu0 0
        %462 = vmatmul.mubr.bf16.gmra.mxu0 %v390
        %v463 = vpop.f32.mrf.mxu0
        %v464 = vadd.f32 %v324, %v463
        %v465 = vpop.f32.mrf.mxu0
        %v466 = vpop.f32.mrf.mxu0
        %v467 = vadd.f32 %v324, %v466
        %v468 = vpop.f32.mrf.mxu0
        %469 = vmatprep.mubr.bf16.mxu0 0
        %470 = vmatmul.mubr.bf16.gmra.mxu0 %v393
        %v471 = vpop.f32.mrf.mxu0
        %v472 = vadd.f32 %v324, %v471
        %v473 = vpop.f32.mrf.mxu0
        %v474 = vpop.f32.mrf.mxu0
        %v475 = vadd.f32 %v324, %v474
        %v476 = vpop.f32.mrf.mxu0
        %477 = vmatprep.mubr.bf16.mxu0 0
        %478 = vmatmul.mubr.bf16.gmra.mxu0 %v396
        %v479 = vpop.f32.mrf.mxu0
        %v480 = vadd.f32 %v324, %v479
        %v481 = vpop.f32.mrf.mxu0
        %v482 = vpop.f32.mrf.mxu0
        %v483 = vadd.f32 %v324, %v482
        %v484 = vpop.f32.mrf.mxu0
        %485 = vmatprep.mubr.bf16.mxu0 0
        %486 = vmatmul.mubr.bf16.gmra.mxu0 %v399
        %v487 = vpop.f32.mrf.mxu0
        %v488 = vadd.f32 %v324, %v487
        %v489 = vpop.f32.mrf.mxu0
        %v490 = vpop.f32.mrf.mxu0
        %v491 = vadd.f32 %v324, %v490
        %v492 = vpop.f32.mrf.mxu0
        %493 = vmatprep.mubr.bf16.mxu0 0
        %494 = vmatmul.mubr.bf16.gmra.mxu0 %v402
        %v495 = vpop.f32.mrf.mxu0
        %v496 = vadd.f32 %v324, %v495
        %v497 = vpop.f32.mrf.mxu0
        %v498 = vpop.f32.mrf.mxu0
        %v499 = vadd.f32 %v324, %v498
        %v500 = vpop.f32.mrf.mxu0
        %501 = vmatprep.mubr.bf16.mxu0 0
        %502 = vmatmul.mubr.bf16.gmra.mxu0 %v405
        %v503 = vpop.f32.mrf.mxu0
        %v504 = vadd.f32 %v324, %v503
        %v505 = vpop.f32.mrf.mxu0
        %v506 = vpop.f32.mrf.mxu0
        %v507 = vadd.f32 %v324, %v506
        %v508 = vpop.f32.mrf.mxu0
        %509 = vmatprep.mubr.bf16.mxu0 0
        %510 = vmatmul.mubr.bf16.gmra.mxu0 %v408
        %v511 = vpop.f32.mrf.mxu0
        %v512 = vadd.f32 %v324, %v511
        %v513 = vpop.f32.mrf.mxu0
        %v514 = vpop.f32.mrf.mxu0
        %v515 = vadd.f32 %v324, %v514
        %v516 = vpop.f32.mrf.mxu0
        %517 = vmatprep.mubr.bf16.mxu0 0
        %518 = vmatmul.mubr.bf16.gmra.mxu0 %v411
        %v519 = vpop.f32.mrf.mxu0
        %v520 = vadd.f32 %v324, %v519
        %v521 = vpop.f32.mrf.mxu0
        %v522 = vpop.f32.mrf.mxu0
        %v523 = vadd.f32 %v324, %v522
        %v524 = vpop.f32.mrf.mxu0
        %525 = vdwg.mxu0
        %v526 = vmax.f32 %v448, 0.0
        %v527 = vmax.f32 %v451, 0.0
        %v528 = vmax.f32 %v456, 0.0
        %v529 = vmax.f32 %v459, 0.0
        %v530 = vmax.f32 %v464, 0.0
        %v531 = vmax.f32 %v467, 0.0
        %v532 = vmax.f32 %v472, 0.0
        %v533 = vmax.f32 %v475, 0.0
        %v534 = vmax.f32 %v480, 0.0
        %v535 = vmax.f32 %v483, 0.0
        %v536 = vmax.f32 %v488, 0.0
        %v537 = vmax.f32 %v491, 0.0
        %v538 = vmax.f32 %v496, 0.0
        %v539 = vmax.f32 %v499, 0.0
        %v540 = vmax.f32 %v504, 0.0
        %v541 = vmax.f32 %v507, 0.0
        %v542 = vmax.f32 %v512, 0.0
        %v543 = vmax.f32 %v515, 0.0
        %v544 = vmax.f32 %v520, 0.0
        %v545 = vmax.f32 %v523, 0.0
        %s546 = ssub.s32 %s293, 1
        %v547 = vstv %s546
        %v548 = vadd.s32 %v547, 1
        %v549 = vadd.s32 %v547, 2
        %v550 = vadd.s32 %v547, 3
        %v551 = vadd.s32 %v547, 4
        %v552 = vadd.s32 %v547, 5
        %v553 = vadd.s32 %v547, 6
        %v554 = vadd.s32 %v547, 7
        %v555 = vadd.s32 %v547, 8
        %v556 = vadd.s32 %v547, 9
        %vm557 = vcmp.ge.s32.totalorder %v547, 0
        %vm558 = vcmp.ge.s32.totalorder %v548, 0
        %vm559 = vcmp.ge.s32.totalorder %v549, 0
        %vm560 = vcmp.ge.s32.totalorder %v550, 0
        %vm561 = vcmp.ge.s32.totalorder %v551, 0
        %vm562 = vcmp.ge.s32.totalorder %v552, 0
        %vm563 = vcmp.ge.s32.totalorder %v553, 0
        %vm564 = vcmp.ge.s32.totalorder %v554, 0
        %vm565 = vcmp.ge.s32.totalorder %v555, 0
        %vm566 = vcmp.ge.s32.totalorder %v556, 0
        %vm567 = vcmp.lt.s32.totalorder %v547, 16
        %vm568 = vcmp.lt.s32.totalorder %v548, 16
        %vm569 = vcmp.lt.s32.totalorder %v549, 16
        %vm570 = vcmp.lt.s32.totalorder %v550, 16
        %vm571 = vcmp.lt.s32.totalorder %v551, 16
        %vm572 = vcmp.lt.s32.totalorder %v552, 16
        %vm573 = vcmp.lt.s32.totalorder %v553, 16
        %vm574 = vcmp.lt.s32.totalorder %v554, 16
        %vm575 = vcmp.lt.s32.totalorder %v555, 16
        %vm576 = vcmp.lt.s32.totalorder %v556, 16
        %vm577 = vmand %vm557, %vm567
        %vm578 = vmand %vm558, %vm568
        %vm579 = vmand %vm559, %vm569
        %vm580 = vmand %vm560, %vm570
        %vm581 = vmand %vm561, %vm571
        %vm582 = vmand %vm562, %vm572
        %vm583 = vmand %vm563, %vm573
        %vm584 = vmand %vm564, %vm574
        %vm585 = vmand %vm565, %vm575
        %vm586 = vmand %vm566, %vm576
        %v587 = vsel %vm577, %v526, 0.0
        %v588 = vsel %vm577, %v527, 0.0
        %v589 = vsel %vm578, %v528, 0.0
        %v590 = vsel %vm578, %v529, 0.0
        %v591 = vsel %vm579, %v530, 0.0
        %v592 = vsel %vm579, %v531, 0.0
        %v593 = vsel %vm580, %v532, 0.0
        %v594 = vsel %vm580, %v533, 0.0
        %v595 = vsel %vm581, %v534, 0.0
        %v596 = vsel %vm581, %v535, 0.0
        %v597 = vsel %vm582, %v536, 0.0
        %v598 = vsel %vm582, %v537, 0.0
        %v599 = vsel %vm583, %v538, 0.0
        %v600 = vsel %vm583, %v539, 0.0
        %v601 = vsel %vm584, %v540, 0.0
        %v602 = vsel %vm584, %v541, 0.0
        %v603 = vsel %vm585, %v542, 0.0
        %v604 = vsel %vm585, %v543, 0.0
        %v605 = vsel %vm586, %v544, 0.0
        %v606 = vsel %vm586, %v545, 0.0
        %v607 = vpack.c.bf16 %v588, %v587
        %v608 = vpack.c.bf16 %v590, %v589
        %v609 = vpack.c.bf16 %v592, %v591
        %v610 = vpack.c.bf16 %v594, %v593
        %v611 = vpack.c.bf16 %v596, %v595
        %v612 = vpack.c.bf16 %v598, %v597
        %v613 = vpack.c.bf16 %v600, %v599
        %v614 = vpack.c.bf16 %v602, %v601
        %v615 = vpack.c.bf16 %v604, %v603
        %v616 = vpack.c.bf16 %v606, %v605
        %v618 = vshrl.u32 %v607, 16
        %v620 = vrot.slane %v618, 7
        %v621 = vshll.u32 %v607, 16
        %v623 = vor.u32 %v620, %v621
        %v625 = vshrl.u32 %v608, 16
        %v627 = vrot.slane %v625, 7
        %v628 = vshll.u32 %v608, 16
        %v630 = vor.u32 %v627, %v628
        %v632 = vshrl.u32 %v609, 16
        %v634 = vrot.slane %v632, 7
        %v635 = vshll.u32 %v609, 16
        %v637 = vor.u32 %v634, %v635
        %v639 = vshrl.u32 %v610, 16
        %v641 = vrot.slane %v639, 7
        %v642 = vshll.u32 %v610, 16
        %v644 = vor.u32 %v641, %v642
        %v646 = vshrl.u32 %v611, 16
        %v648 = vrot.slane %v646, 7
        %v649 = vshll.u32 %v611, 16
        %v651 = vor.u32 %v648, %v649
        %v653 = vshrl.u32 %v612, 16
        %v655 = vrot.slane %v653, 7
        %v656 = vshll.u32 %v612, 16
        %v658 = vor.u32 %v655, %v656
        %v660 = vshrl.u32 %v613, 16
        %v662 = vrot.slane %v660, 7
        %v663 = vshll.u32 %v613, 16
        %v665 = vor.u32 %v662, %v663
        %v667 = vshrl.u32 %v614, 16
        %v669 = vrot.slane %v667, 7
        %v670 = vshll.u32 %v614, 16
        %v672 = vor.u32 %v669, %v670
        %v674 = vshrl.u32 %v615, 16
        %v676 = vrot.slane %v674, 7
        %v677 = vshll.u32 %v615, 16
        %v679 = vor.u32 %v676, %v677
        %v681 = vshrl.u32 %v616, 16
        %v683 = vrot.slane %v681, 7
        %v684 = vshll.u32 %v616, 16
        %v686 = vor.u32 %v683, %v684
        %vm707 = vcmask 1040384
        %vm708 = vsmask.f32 256
        %vm709 = vmand %vm707, %vm708
        %v710 = vsel %vm709, 0, %v623
        %v711 = vsel %vm709, 0, %v630
        %v712 = vsel %vm709, 0, %v637
        %v713 = vsel %vm709, 0, %v644
        %v714 = vsel %vm709, 0, %v651
        %v715 = vsel %vm709, 0, %v658
        %v716 = vsel %vm709, 0, %v665
        %v717 = vsel %vm709, 0, %v672
        %v718 = vsel %vm709, 0, %v679
        %v719 = vsel %vm709, 0, %v686
        %v720 = vsel %vm709, %v620, 0
        %v721 = vsel %vm709, %v627, 0
        %v722 = vsel %vm709, %v634, 0
        %v723 = vsel %vm709, %v641, 0
        %v724 = vsel %vm709, %v648, 0
        %v725 = vsel %vm709, %v655, 0
        %v726 = vsel %vm709, %v662, 0
        %v727 = vsel %vm709, %v669, 0
        %v728 = vsel %vm709, %v676, 0
        %v729 = vsel %vm709, %v683, 0
        %v730 = vld [vmem:[%s2] sm:$0x3]
        %vm731 = vsmask.f32 7424
        %v733 = vshrl.u32 %v710, 16
        %v735 = vshll.u32 %v710, 16
        %v737 = vrot.slane %v735, 1
        %v738 = vor.u32 %v733, %v737
        %v740 = vshll.u32 %v720, 16
        %v742 = vrot.slane %v740, 1
        %v743 = vsel %vm731, %v738, %v742
        %v745 = vshrl.u32 %v711, 16
        %v747 = vshll.u32 %v711, 16
        %v749 = vrot.slane %v747, 1
        %v750 = vor.u32 %v745, %v749
        %v752 = vshll.u32 %v721, 16
        %v754 = vrot.slane %v752, 1
        %v755 = vsel %vm731, %v750, %v754
        %v757 = vshrl.u32 %v712, 16
        %v759 = vshll.u32 %v712, 16
        %v761 = vrot.slane %v759, 1
        %v762 = vor.u32 %v757, %v761
        %v764 = vshll.u32 %v722, 16
        %v766 = vrot.slane %v764, 1
        %v767 = vsel %vm731, %v762, %v766
        %v769 = vshrl.u32 %v713, 16
        %v771 = vshll.u32 %v713, 16
        %v773 = vrot.slane %v771, 1
        %v774 = vor.u32 %v769, %v773
        %v776 = vshll.u32 %v723, 16
        %v778 = vrot.slane %v776, 1
        %v779 = vsel %vm731, %v774, %v778
        %v781 = vshrl.u32 %v714, 16
        %v783 = vshll.u32 %v714, 16
        %v785 = vrot.slane %v783, 1
        %v786 = vor.u32 %v781, %v785
        %v788 = vshll.u32 %v724, 16
        %v790 = vrot.slane %v788, 1
        %v791 = vsel %vm731, %v786, %v790
        %v793 = vshrl.u32 %v715, 16
        %v795 = vshll.u32 %v715, 16
        %v797 = vrot.slane %v795, 1
        %v798 = vor.u32 %v793, %v797
        %v800 = vshll.u32 %v725, 16
        %v802 = vrot.slane %v800, 1
        %v803 = vsel %vm731, %v798, %v802
        %v805 = vshrl.u32 %v716, 16
        %v807 = vshll.u32 %v716, 16
        %v809 = vrot.slane %v807, 1
        %v810 = vor.u32 %v805, %v809
        %v812 = vshll.u32 %v726, 16
        %v814 = vrot.slane %v812, 1
        %v815 = vsel %vm731, %v810, %v814
        %v817 = vshrl.u32 %v717, 16
        %v819 = vshll.u32 %v717, 16
        %v821 = vrot.slane %v819, 1
        %v822 = vor.u32 %v817, %v821
        %v824 = vshll.u32 %v727, 16
        %v826 = vrot.slane %v824, 1
        %v827 = vsel %vm731, %v822, %v826
        %s828 = scalar_lea.vmem %s2, 2
        %v829 = vld [vmem:[%s828] sm:$0x3]
        %vm830 = vcmask 31744
        %v832 = vsel %vm830, %v743, 0
        %v835 = vsel %vm830, %v755, 0
        %v838 = vsel %vm830, %v767, 0
        %v841 = vsel %vm830, %v779, 0
        %v844 = vsel %vm830, %v791, 0
        %v847 = vsel %vm830, %v803, 0
        %v850 = vsel %vm830, %v815, 0
        %v853 = vsel %vm830, %v827, 0
        %vm855 = vcmask 1041408
        %v857 = vsel %vm855, %v829, 0
        %859 = vmatprep.subr.bf16.mxu0 0
        %860 = vmatpush1.bf16.msra.mxu0 0
        %861 = vmatprep.subr.bf16.mxu0 0
        %862 = vmatpush1.bf16.msra.mxu0 0
        %863 = vmatprep.subr.bf16.mxu0 0
        %864 = vmatpush1.bf16.msra.mxu0 0
        %865 = vmatprep.subr.bf16.mxu0 0
        %866 = vmatpush1.bf16.msra.mxu0 0
        %867 = vmatprep.subr.bf16.mxu0 0
        %868 = vmatpush1.bf16.msra.mxu0 0
        %869 = vmatprep.subr.bf16.mxu0 0
        %870 = vmatpush1.bf16.msra.mxu0 0
        %871 = vmatprep.subr.bf16.mxu0 0
        %872 = vmatpush1.bf16.msra.mxu0 0
        %873 = vmatprep.subr.bf16.mxu0 0
        %874 = vmatpush1.bf16.msra.mxu0 %v857
        %875 = vmatprep.subr.bf16.mxu0 0
        %876 = vmatpush2.bf16.msra.mxu0 0
        %877 = vmatprep.subr.bf16.mxu0 0
        %878 = vmatpush2.bf16.msra.mxu0 0
        %879 = vmatprep.subr.bf16.mxu0 0
        %880 = vmatpush2.bf16.msra.mxu0 0
        %881 = vmatprep.subr.bf16.mxu0 0
        %882 = vmatpush2.bf16.msra.mxu0 0
        %883 = vmatprep.subr.bf16.mxu0 0
        %884 = vmatpush2.bf16.msra.mxu0 0
        %885 = vmatprep.subr.bf16.mxu0 0
        %886 = vmatpush2.bf16.msra.mxu0 0
        %887 = vmatprep.subr.bf16.mxu0 0
        %888 = vmatpush2.bf16.msra.mxu0 0
        %889 = vmatprep.subr.bf16.mxu0 0
        %890 = vmatpush2.bf16.msra.mxu0 0
        %891 = vmatprep.mubr.bf16.mxu0 0
        %892 = vmatmul.mubr.bf16.gmra.mxu0 %v832
        %v893 = vpop.f32.mrf.mxu0
        %v894 = vadd.f32 0.0, %v893
        %v895 = vpop.f32.mrf.mxu0
        %v896 = vpop.f32.mrf.mxu0
        %v897 = vadd.f32 0.0, %v896
        %v898 = vpop.f32.mrf.mxu0
        %899 = vmatprep.mubr.bf16.mxu0 0
        %900 = vmatmul.mubr.bf16.gmra.mxu0 %v835
        %v901 = vpop.f32.mrf.mxu0
        %v902 = vadd.f32 0.0, %v901
        %v903 = vpop.f32.mrf.mxu0
        %v904 = vpop.f32.mrf.mxu0
        %v905 = vadd.f32 0.0, %v904
        %v906 = vpop.f32.mrf.mxu0
        %907 = vmatprep.mubr.bf16.mxu0 0
        %908 = vmatmul.mubr.bf16.gmra.mxu0 %v838
        %v909 = vpop.f32.mrf.mxu0
        %v910 = vadd.f32 0.0, %v909
        %v911 = vpop.f32.mrf.mxu0
        %v912 = vpop.f32.mrf.mxu0
        %v913 = vadd.f32 0.0, %v912
        %v914 = vpop.f32.mrf.mxu0
        %915 = vmatprep.mubr.bf16.mxu0 0
        %916 = vmatmul.mubr.bf16.gmra.mxu0 %v841
        %v917 = vpop.f32.mrf.mxu0
        %v918 = vadd.f32 0.0, %v917
        %v919 = vpop.f32.mrf.mxu0
        %v920 = vpop.f32.mrf.mxu0
        %v921 = vadd.f32 0.0, %v920
        %v922 = vpop.f32.mrf.mxu0
        %923 = vmatprep.mubr.bf16.mxu0 0
        %924 = vmatmul.mubr.bf16.gmra.mxu0 %v844
        %v925 = vpop.f32.mrf.mxu0
        %v926 = vadd.f32 0.0, %v925
        %v927 = vpop.f32.mrf.mxu0
        %v928 = vpop.f32.mrf.mxu0
        %v929 = vadd.f32 0.0, %v928
        %v930 = vpop.f32.mrf.mxu0
        %931 = vmatprep.mubr.bf16.mxu0 0
        %932 = vmatmul.mubr.bf16.gmra.mxu0 %v847
        %v933 = vpop.f32.mrf.mxu0
        %v934 = vadd.f32 0.0, %v933
        %v935 = vpop.f32.mrf.mxu0
        %v936 = vpop.f32.mrf.mxu0
        %v937 = vadd.f32 0.0, %v936
        %v938 = vpop.f32.mrf.mxu0
        %939 = vmatprep.mubr.bf16.mxu0 0
        %940 = vmatmul.mubr.bf16.gmra.mxu0 %v850
        %v941 = vpop.f32.mrf.mxu0
        %v942 = vadd.f32 0.0, %v941
        %v943 = vpop.f32.mrf.mxu0
        %v944 = vpop.f32.mrf.mxu0
        %v945 = vadd.f32 0.0, %v944
        %v946 = vpop.f32.mrf.mxu0
        %947 = vmatprep.mubr.bf16.mxu0 0
        %948 = vmatmul.mubr.bf16.gmra.mxu0 %v853
        %v949 = vpop.f32.mrf.mxu0
        %v950 = vadd.f32 0.0, %v949
        %v951 = vpop.f32.mrf.mxu0
        %v952 = vpop.f32.mrf.mxu0
        %v953 = vadd.f32 0.0, %v952
        %v954 = vpop.f32.mrf.mxu0
        %955 = vdwg.mxu0
        %v956 = vsel %vm830, %v710, 0
        %v958 = vsel %vm830, %v711, 0
        %v960 = vsel %vm830, %v712, 0
        %v962 = vsel %vm830, %v713, 0
        %v964 = vsel %vm830, %v714, 0
        %v966 = vsel %vm830, %v715, 0
        %v968 = vsel %vm830, %v716, 0
        %v970 = vsel %vm830, %v717, 0
        %v973 = vsel %vm855, %v730, 0
        %975 = vmatprep.subr.bf16.mxu0 0
        %976 = vmatpush1.bf16.msra.mxu0 0
        %977 = vmatprep.subr.bf16.mxu0 0
        %978 = vmatpush1.bf16.msra.mxu0 0
        %979 = vmatprep.subr.bf16.mxu0 0
        %980 = vmatpush1.bf16.msra.mxu0 0
        %981 = vmatprep.subr.bf16.mxu0 0
        %982 = vmatpush1.bf16.msra.mxu0 0
        %983 = vmatprep.subr.bf16.mxu0 0
        %984 = vmatpush1.bf16.msra.mxu0 0
        %985 = vmatprep.subr.bf16.mxu0 0
        %986 = vmatpush1.bf16.msra.mxu0 0
        %987 = vmatprep.subr.bf16.mxu0 0
        %988 = vmatpush1.bf16.msra.mxu0 0
        %989 = vmatprep.subr.bf16.mxu0 0
        %990 = vmatpush1.bf16.msra.mxu0 %v973
        %991 = vmatprep.subr.bf16.mxu0 0
        %992 = vmatpush2.bf16.msra.mxu0 0
        %993 = vmatprep.subr.bf16.mxu0 0
        %994 = vmatpush2.bf16.msra.mxu0 0
        %995 = vmatprep.subr.bf16.mxu0 0
        %996 = vmatpush2.bf16.msra.mxu0 0
        %997 = vmatprep.subr.bf16.mxu0 0
        %998 = vmatpush2.bf16.msra.mxu0 0
        %999 = vmatprep.subr.bf16.mxu0 0
        %1000 = vmatpush2.bf16.msra.mxu0 0
        %1001 = vmatprep.subr.bf16.mxu0 0
        %1002 = vmatpush2.bf16.msra.mxu0 0
        %1003 = vmatprep.subr.bf16.mxu0 0
        %1004 = vmatpush2.bf16.msra.mxu0 0
        %1005 = vmatprep.subr.bf16.mxu0 0
        %1006 = vmatpush2.bf16.msra.mxu0 0
        %1007 = vmatprep.mubr.bf16.mxu0 0
        %1008 = vmatmul.mubr.bf16.gmra.mxu0 %v956
        %v1009 = vpop.f32.mrf.mxu0
        %v1010 = vadd.f32 %v894, %v1009
        %v1011 = vpop.f32.mrf.mxu0
        %v1012 = vpop.f32.mrf.mxu0
        %v1013 = vadd.f32 %v897, %v1012
        %v1014 = vpop.f32.mrf.mxu0
        %1015 = vmatprep.mubr.bf16.mxu0 0
        %1016 = vmatmul.mubr.bf16.gmra.mxu0 %v958
        %v1017 = vpop.f32.mrf.mxu0
        %v1018 = vadd.f32 %v902, %v1017
        %v1019 = vpop.f32.mrf.mxu0
        %v1020 = vpop.f32.mrf.mxu0
        %v1021 = vadd.f32 %v905, %v1020
        %v1022 = vpop.f32.mrf.mxu0
        %1023 = vmatprep.mubr.bf16.mxu0 0
        %1024 = vmatmul.mubr.bf16.gmra.mxu0 %v960
        %v1025 = vpop.f32.mrf.mxu0
        %v1026 = vadd.f32 %v910, %v1025
        %v1027 = vpop.f32.mrf.mxu0
        %v1028 = vpop.f32.mrf.mxu0
        %v1029 = vadd.f32 %v913, %v1028
        %v1030 = vpop.f32.mrf.mxu0
        %1031 = vmatprep.mubr.bf16.mxu0 0
        %1032 = vmatmul.mubr.bf16.gmra.mxu0 %v962
        %v1033 = vpop.f32.mrf.mxu0
        %v1034 = vadd.f32 %v918, %v1033
        %v1035 = vpop.f32.mrf.mxu0
        %v1036 = vpop.f32.mrf.mxu0
        %v1037 = vadd.f32 %v921, %v1036
        %v1038 = vpop.f32.mrf.mxu0
        %1039 = vmatprep.mubr.bf16.mxu0 0
        %1040 = vmatmul.mubr.bf16.gmra.mxu0 %v964
        %v1041 = vpop.f32.mrf.mxu0
        %v1042 = vadd.f32 %v926, %v1041
        %v1043 = vpop.f32.mrf.mxu0
        %v1044 = vpop.f32.mrf.mxu0
        %v1045 = vadd.f32 %v929, %v1044
        %v1046 = vpop.f32.mrf.mxu0
        %1047 = vmatprep.mubr.bf16.mxu0 0
        %1048 = vmatmul.mubr.bf16.gmra.mxu0 %v966
        %v1049 = vpop.f32.mrf.mxu0
        %v1050 = vadd.f32 %v934, %v1049
        %v1051 = vpop.f32.mrf.mxu0
        %v1052 = vpop.f32.mrf.mxu0
        %v1053 = vadd.f32 %v937, %v1052
        %v1054 = vpop.f32.mrf.mxu0
        %1055 = vmatprep.mubr.bf16.mxu0 0
        %1056 = vmatmul.mubr.bf16.gmra.mxu0 %v968
        %v1057 = vpop.f32.mrf.mxu0
        %v1058 = vadd.f32 %v942, %v1057
        %v1059 = vpop.f32.mrf.mxu0
        %v1060 = vpop.f32.mrf.mxu0
        %v1061 = vadd.f32 %v945, %v1060
        %v1062 = vpop.f32.mrf.mxu0
        %1063 = vmatprep.mubr.bf16.mxu0 0
        %1064 = vmatmul.mubr.bf16.gmra.mxu0 %v970
        %v1065 = vpop.f32.mrf.mxu0
        %v1066 = vadd.f32 %v950, %v1065
        %v1067 = vpop.f32.mrf.mxu0
        %v1068 = vpop.f32.mrf.mxu0
        %v1069 = vadd.f32 %v953, %v1068
        %v1070 = vpop.f32.mrf.mxu0
        %1071 = vdwg.mxu0
        %vm1088 = vcmask 1046528
        %v1089 = vrot.slane %v710, 1
        %v1090 = vrot.slane %v720, 1
        %v1091 = vsel %vm1088, %v1089, %v1090
        %v1092 = vrot.slane %v711, 1
        %v1093 = vrot.slane %v721, 1
        %v1094 = vsel %vm1088, %v1092, %v1093
        %v1095 = vrot.slane %v712, 1
        %v1096 = vrot.slane %v722, 1
        %v1097 = vsel %vm1088, %v1095, %v1096
        %v1098 = vrot.slane %v713, 1
        %v1099 = vrot.slane %v723, 1
        %v1100 = vsel %vm1088, %v1098, %v1099
        %v1101 = vrot.slane %v714, 1
        %v1102 = vrot.slane %v724, 1
        %v1103 = vsel %vm1088, %v1101, %v1102
        %v1104 = vrot.slane %v715, 1
        %v1105 = vrot.slane %v725, 1
        %v1106 = vsel %vm1088, %v1104, %v1105
        %v1107 = vrot.slane %v716, 1
        %v1108 = vrot.slane %v726, 1
        %v1109 = vsel %vm1088, %v1107, %v1108
        %v1110 = vrot.slane %v717, 1
        %v1111 = vrot.slane %v727, 1
        %v1112 = vsel %vm1088, %v1110, %v1111
        %s1113 = scalar_lea.vmem %s2, 4
        %v1114 = vld [vmem:[%s1113] sm:$0x3]
        %v1116 = vsel %vm830, %v1091, 0
        %v1119 = vsel %vm830, %v1094, 0
        %v1122 = vsel %vm830, %v1097, 0
        %v1125 = vsel %vm830, %v1100, 0
        %v1128 = vsel %vm830, %v1103, 0
        %v1131 = vsel %vm830, %v1106, 0
        %v1134 = vsel %vm830, %v1109, 0
        %v1137 = vsel %vm830, %v1112, 0
        %v1140 = vsel %vm855, %v1114, 0
        %1142 = vmatprep.subr.bf16.mxu0 0
        %1143 = vmatpush1.bf16.msra.mxu0 0
        %1144 = vmatprep.subr.bf16.mxu0 0
        %1145 = vmatpush1.bf16.msra.mxu0 0
        %1146 = vmatprep.subr.bf16.mxu0 0
        %1147 = vmatpush1.bf16.msra.mxu0 0
        %1148 = vmatprep.subr.bf16.mxu0 0
        %1149 = vmatpush1.bf16.msra.mxu0 0
        %1150 = vmatprep.subr.bf16.mxu0 0
        %1151 = vmatpush1.bf16.msra.mxu0 0
        %1152 = vmatprep.subr.bf16.mxu0 0
        %1153 = vmatpush1.bf16.msra.mxu0 0
        %1154 = vmatprep.subr.bf16.mxu0 0
        %1155 = vmatpush1.bf16.msra.mxu0 0
        %1156 = vmatprep.subr.bf16.mxu0 0
        %1157 = vmatpush1.bf16.msra.mxu0 %v1140
        %1158 = vmatprep.subr.bf16.mxu0 0
        %1159 = vmatpush2.bf16.msra.mxu0 0
        %1160 = vmatprep.subr.bf16.mxu0 0
        %1161 = vmatpush2.bf16.msra.mxu0 0
        %1162 = vmatprep.subr.bf16.mxu0 0
        %1163 = vmatpush2.bf16.msra.mxu0 0
        %1164 = vmatprep.subr.bf16.mxu0 0
        %1165 = vmatpush2.bf16.msra.mxu0 0
        %1166 = vmatprep.subr.bf16.mxu0 0
        %1167 = vmatpush2.bf16.msra.mxu0 0
        %1168 = vmatprep.subr.bf16.mxu0 0
        %1169 = vmatpush2.bf16.msra.mxu0 0
        %1170 = vmatprep.subr.bf16.mxu0 0
        %1171 = vmatpush2.bf16.msra.mxu0 0
        %1172 = vmatprep.subr.bf16.mxu0 0
        %1173 = vmatpush2.bf16.msra.mxu0 0
        %1174 = vmatprep.mubr.bf16.mxu0 0
        %1175 = vmatmul.mubr.bf16.gmra.mxu0 %v1116
        %v1176 = vpop.f32.mrf.mxu0
        %v1177 = vadd.f32 0.0, %v1176
        %v1178 = vpop.f32.mrf.mxu0
        %v1179 = vpop.f32.mrf.mxu0
        %v1180 = vadd.f32 0.0, %v1179
        %v1181 = vpop.f32.mrf.mxu0
        %1182 = vmatprep.mubr.bf16.mxu0 0
        %1183 = vmatmul.mubr.bf16.gmra.mxu0 %v1119
        %v1184 = vpop.f32.mrf.mxu0
        %v1185 = vadd.f32 0.0, %v1184
        %v1186 = vpop.f32.mrf.mxu0
        %v1187 = vpop.f32.mrf.mxu0
        %v1188 = vadd.f32 0.0, %v1187
        %v1189 = vpop.f32.mrf.mxu0
        %1190 = vmatprep.mubr.bf16.mxu0 0
        %1191 = vmatmul.mubr.bf16.gmra.mxu0 %v1122
        %v1192 = vpop.f32.mrf.mxu0
        %v1193 = vadd.f32 0.0, %v1192
        %v1194 = vpop.f32.mrf.mxu0
        %v1195 = vpop.f32.mrf.mxu0
        %v1196 = vadd.f32 0.0, %v1195
        %v1197 = vpop.f32.mrf.mxu0
        %1198 = vmatprep.mubr.bf16.mxu0 0
        %1199 = vmatmul.mubr.bf16.gmra.mxu0 %v1125
        %v1200 = vpop.f32.mrf.mxu0
        %v1201 = vadd.f32 0.0, %v1200
        %v1202 = vpop.f32.mrf.mxu0
        %v1203 = vpop.f32.mrf.mxu0
        %v1204 = vadd.f32 0.0, %v1203
        %v1205 = vpop.f32.mrf.mxu0
        %1206 = vmatprep.mubr.bf16.mxu0 0
        %1207 = vmatmul.mubr.bf16.gmra.mxu0 %v1128
        %v1208 = vpop.f32.mrf.mxu0
        %v1209 = vadd.f32 0.0, %v1208
        %v1210 = vpop.f32.mrf.mxu0
        %v1211 = vpop.f32.mrf.mxu0
        %v1212 = vadd.f32 0.0, %v1211
        %v1213 = vpop.f32.mrf.mxu0
        %1214 = vmatprep.mubr.bf16.mxu0 0
        %1215 = vmatmul.mubr.bf16.gmra.mxu0 %v1131
        %v1216 = vpop.f32.mrf.mxu0
        %v1217 = vadd.f32 0.0, %v1216
        %v1218 = vpop.f32.mrf.mxu0
        %v1219 = vpop.f32.mrf.mxu0
        %v1220 = vadd.f32 0.0, %v1219
        %v1221 = vpop.f32.mrf.mxu0
        %1222 = vmatprep.mubr.bf16.mxu0 0
        %1223 = vmatmul.mubr.bf16.gmra.mxu0 %v1134
        %v1224 = vpop.f32.mrf.mxu0
        %v1225 = vadd.f32 0.0, %v1224
        %v1226 = vpop.f32.mrf.mxu0
        %v1227 = vpop.f32.mrf.mxu0
        %v1228 = vadd.f32 0.0, %v1227
        %v1229 = vpop.f32.mrf.mxu0
        %1230 = vmatprep.mubr.bf16.mxu0 0
        %1231 = vmatmul.mubr.bf16.gmra.mxu0 %v1137
        %v1232 = vpop.f32.mrf.mxu0
        %v1233 = vadd.f32 0.0, %v1232
        %v1234 = vpop.f32.mrf.mxu0
        %v1235 = vpop.f32.mrf.mxu0
        %v1236 = vadd.f32 0.0, %v1235
        %v1237 = vpop.f32.mrf.mxu0
        %1238 = vdwg.mxu0
        %v1239 = vadd.f32 %v1010, %v1177
        %v1240 = vadd.f32 %v1013, %v1180
        %v1241 = vadd.f32 %v1018, %v1185
        %v1242 = vadd.f32 %v1021, %v1188
        %v1243 = vadd.f32 %v1026, %v1193
        %v1244 = vadd.f32 %v1029, %v1196
        %v1245 = vadd.f32 %v1034, %v1201
        %v1246 = vadd.f32 %v1037, %v1204
        %v1247 = vadd.f32 %v1042, %v1209
        %v1248 = vadd.f32 %v1045, %v1212
        %v1249 = vadd.f32 %v1050, %v1217
        %v1250 = vadd.f32 %v1053, %v1220
        %v1251 = vadd.f32 %v1058, %v1225
        %v1252 = vadd.f32 %v1061, %v1228
        %v1253 = vadd.f32 %v1066, %v1233
        %v1254 = vadd.f32 %v1069, %v1236
        %s1255 = scalar_lea.vmem %s2, 6
        %v1256 = vld [vmem:[%s1255] sm:$0x3]
        %v1258 = vsel %vm830, %v718, 0
        %v1261 = vsel %vm855, %v1256, 0
        %1263 = vmatprep.subr.bf16.mxu0 0
        %1264 = vmatpush1.bf16.msra.mxu0 0
        %1265 = vmatprep.subr.bf16.mxu0 0
        %1266 = vmatpush1.bf16.msra.mxu0 0
        %1267 = vmatprep.subr.bf16.mxu0 0
        %1268 = vmatpush1.bf16.msra.mxu0 0
        %1269 = vmatprep.subr.bf16.mxu0 0
        %1270 = vmatpush1.bf16.msra.mxu0 0
        %1271 = vmatprep.subr.bf16.mxu0 0
        %1272 = vmatpush1.bf16.msra.mxu0 0
        %1273 = vmatprep.subr.bf16.mxu0 0
        %1274 = vmatpush1.bf16.msra.mxu0 0
        %1275 = vmatprep.subr.bf16.mxu0 0
        %1276 = vmatpush1.bf16.msra.mxu0 0
        %1277 = vmatprep.subr.bf16.mxu0 0
        %1278 = vmatpush1.bf16.msra.mxu0 %v1261
        %1279 = vmatprep.subr.bf16.mxu0 0
        %1280 = vmatpush2.bf16.msra.mxu0 0
        %1281 = vmatprep.subr.bf16.mxu0 0
        %1282 = vmatpush2.bf16.msra.mxu0 0
        %1283 = vmatprep.subr.bf16.mxu0 0
        %1284 = vmatpush2.bf16.msra.mxu0 0
        %1285 = vmatprep.subr.bf16.mxu0 0
        %1286 = vmatpush2.bf16.msra.mxu0 0
        %1287 = vmatprep.subr.bf16.mxu0 0
        %1288 = vmatpush2.bf16.msra.mxu0 0
        %1289 = vmatprep.subr.bf16.mxu0 0
        %1290 = vmatpush2.bf16.msra.mxu0 0
        %1291 = vmatprep.subr.bf16.mxu0 0
        %1292 = vmatpush2.bf16.msra.mxu0 0
        %1293 = vmatprep.subr.bf16.mxu0 0
        %1294 = vmatpush2.bf16.msra.mxu0 0
        %1295 = vmatprep.mubr.bf16.mxu0 0
        %1296 = vmatmul.mubr.bf16.gmra.mxu0 %v958
        %v1297 = vpop.f32.mrf.mxu0
        %v1298 = vadd.f32 0.0, %v1297
        %v1299 = vpop.f32.mrf.mxu0
        %v1300 = vpop.f32.mrf.mxu0
        %v1301 = vadd.f32 0.0, %v1300
        %v1302 = vpop.f32.mrf.mxu0
        %1303 = vmatprep.mubr.bf16.mxu0 0
        %1304 = vmatmul.mubr.bf16.gmra.mxu0 %v960
        %v1305 = vpop.f32.mrf.mxu0
        %v1306 = vadd.f32 0.0, %v1305
        %v1307 = vpop.f32.mrf.mxu0
        %v1308 = vpop.f32.mrf.mxu0
        %v1309 = vadd.f32 0.0, %v1308
        %v1310 = vpop.f32.mrf.mxu0
        %1311 = vmatprep.mubr.bf16.mxu0 0
        %1312 = vmatmul.mubr.bf16.gmra.mxu0 %v962
        %v1313 = vpop.f32.mrf.mxu0
        %v1314 = vadd.f32 0.0, %v1313
        %v1315 = vpop.f32.mrf.mxu0
        %v1316 = vpop.f32.mrf.mxu0
        %v1317 = vadd.f32 0.0, %v1316
        %v1318 = vpop.f32.mrf.mxu0
        %1319 = vmatprep.mubr.bf16.mxu0 0
        %1320 = vmatmul.mubr.bf16.gmra.mxu0 %v964
        %v1321 = vpop.f32.mrf.mxu0
        %v1322 = vadd.f32 0.0, %v1321
        %v1323 = vpop.f32.mrf.mxu0
        %v1324 = vpop.f32.mrf.mxu0
        %v1325 = vadd.f32 0.0, %v1324
        %v1326 = vpop.f32.mrf.mxu0
        %1327 = vmatprep.mubr.bf16.mxu0 0
        %1328 = vmatmul.mubr.bf16.gmra.mxu0 %v966
        %v1329 = vpop.f32.mrf.mxu0
        %v1330 = vadd.f32 0.0, %v1329
        %v1331 = vpop.f32.mrf.mxu0
        %v1332 = vpop.f32.mrf.mxu0
        %v1333 = vadd.f32 0.0, %v1332
        %v1334 = vpop.f32.mrf.mxu0
        %1335 = vmatprep.mubr.bf16.mxu0 0
        %1336 = vmatmul.mubr.bf16.gmra.mxu0 %v968
        %v1337 = vpop.f32.mrf.mxu0
        %v1338 = vadd.f32 0.0, %v1337
        %v1339 = vpop.f32.mrf.mxu0
        %v1340 = vpop.f32.mrf.mxu0
        %v1341 = vadd.f32 0.0, %v1340
        %v1342 = vpop.f32.mrf.mxu0
        %1343 = vmatprep.mubr.bf16.mxu0 0
        %1344 = vmatmul.mubr.bf16.gmra.mxu0 %v970
        %v1345 = vpop.f32.mrf.mxu0
        %v1346 = vadd.f32 0.0, %v1345
        %v1347 = vpop.f32.mrf.mxu0
        %v1348 = vpop.f32.mrf.mxu0
        %v1349 = vadd.f32 0.0, %v1348
        %v1350 = vpop.f32.mrf.mxu0
        %1351 = vmatprep.mubr.bf16.mxu0 0
        %1352 = vmatmul.mubr.bf16.gmra.mxu0 %v1258
        %v1353 = vpop.f32.mrf.mxu0
        %v1354 = vadd.f32 0.0, %v1353
        %v1355 = vpop.f32.mrf.mxu0
        %v1356 = vpop.f32.mrf.mxu0
        %v1357 = vadd.f32 0.0, %v1356
        %v1358 = vpop.f32.mrf.mxu0
        %1359 = vdwg.mxu0
        %v1360 = vadd.f32 %v1239, %v1298
        %v1361 = vadd.f32 %v1240, %v1301
        %v1362 = vadd.f32 %v1241, %v1306
        %v1363 = vadd.f32 %v1242, %v1309
        %v1364 = vadd.f32 %v1243, %v1314
        %v1365 = vadd.f32 %v1244, %v1317
        %v1366 = vadd.f32 %v1245, %v1322
        %v1367 = vadd.f32 %v1246, %v1325
        %v1368 = vadd.f32 %v1247, %v1330
        %v1369 = vadd.f32 %v1248, %v1333
        %v1370 = vadd.f32 %v1249, %v1338
        %v1371 = vadd.f32 %v1250, %v1341
        %v1372 = vadd.f32 %v1251, %v1346
        %v1373 = vadd.f32 %v1252, %v1349
        %v1374 = vadd.f32 %v1253, %v1354
        %v1375 = vadd.f32 %v1254, %v1357
        %v1376 = vshrl.u32 %v718, 16
        %v1378 = vshll.u32 %v718, 16
        %v1380 = vrot.slane %v1378, 1
        %v1381 = vor.u32 %v1376, %v1380
        %v1383 = vshll.u32 %v728, 16
        %v1385 = vrot.slane %v1383, 1
        %v1386 = vsel %vm731, %v1381, %v1385
        %s1387 = scalar_lea.vmem %s2, 8
        %v1388 = vld [vmem:[%s1387] sm:$0x3]
        %v1390 = vsel %vm830, %v1386, 0
        %v1393 = vsel %vm855, %v1388, 0
        %1395 = vmatprep.subr.bf16.mxu0 0
        %1396 = vmatpush1.bf16.msra.mxu0 0
        %1397 = vmatprep.subr.bf16.mxu0 0
        %1398 = vmatpush1.bf16.msra.mxu0 0
        %1399 = vmatprep.subr.bf16.mxu0 0
        %1400 = vmatpush1.bf16.msra.mxu0 0
        %1401 = vmatprep.subr.bf16.mxu0 0
        %1402 = vmatpush1.bf16.msra.mxu0 0
        %1403 = vmatprep.subr.bf16.mxu0 0
        %1404 = vmatpush1.bf16.msra.mxu0 0
        %1405 = vmatprep.subr.bf16.mxu0 0
        %1406 = vmatpush1.bf16.msra.mxu0 0
        %1407 = vmatprep.subr.bf16.mxu0 0
        %1408 = vmatpush1.bf16.msra.mxu0 0
        %1409 = vmatprep.subr.bf16.mxu0 0
        %1410 = vmatpush1.bf16.msra.mxu0 %v1393
        %1411 = vmatprep.subr.bf16.mxu0 0
        %1412 = vmatpush2.bf16.msra.mxu0 0
        %1413 = vmatprep.subr.bf16.mxu0 0
        %1414 = vmatpush2.bf16.msra.mxu0 0
        %1415 = vmatprep.subr.bf16.mxu0 0
        %1416 = vmatpush2.bf16.msra.mxu0 0
        %1417 = vmatprep.subr.bf16.mxu0 0
        %1418 = vmatpush2.bf16.msra.mxu0 0
        %1419 = vmatprep.subr.bf16.mxu0 0
        %1420 = vmatpush2.bf16.msra.mxu0 0
        %1421 = vmatprep.subr.bf16.mxu0 0
        %1422 = vmatpush2.bf16.msra.mxu0 0
        %1423 = vmatprep.subr.bf16.mxu0 0
        %1424 = vmatpush2.bf16.msra.mxu0 0
        %1425 = vmatprep.subr.bf16.mxu0 0
        %1426 = vmatpush2.bf16.msra.mxu0 0
        %1427 = vmatprep.mubr.bf16.mxu0 0
        %1428 = vmatmul.mubr.bf16.gmra.mxu0 %v835
        %v1429 = vpop.f32.mrf.mxu0
        %v1430 = vadd.f32 0.0, %v1429
        %v1431 = vpop.f32.mrf.mxu0
        %v1432 = vpop.f32.mrf.mxu0
        %v1433 = vadd.f32 0.0, %v1432
        %v1434 = vpop.f32.mrf.mxu0
        %1435 = vmatprep.mubr.bf16.mxu0 0
        %1436 = vmatmul.mubr.bf16.gmra.mxu0 %v838
        %v1437 = vpop.f32.mrf.mxu0
        %v1438 = vadd.f32 0.0, %v1437
        %v1439 = vpop.f32.mrf.mxu0
        %v1440 = vpop.f32.mrf.mxu0
        %v1441 = vadd.f32 0.0, %v1440
        %v1442 = vpop.f32.mrf.mxu0
        %1443 = vmatprep.mubr.bf16.mxu0 0
        %1444 = vmatmul.mubr.bf16.gmra.mxu0 %v841
        %v1445 = vpop.f32.mrf.mxu0
        %v1446 = vadd.f32 0.0, %v1445
        %v1447 = vpop.f32.mrf.mxu0
        %v1448 = vpop.f32.mrf.mxu0
        %v1449 = vadd.f32 0.0, %v1448
        %v1450 = vpop.f32.mrf.mxu0
        %1451 = vmatprep.mubr.bf16.mxu0 0
        %1452 = vmatmul.mubr.bf16.gmra.mxu0 %v844
        %v1453 = vpop.f32.mrf.mxu0
        %v1454 = vadd.f32 0.0, %v1453
        %v1455 = vpop.f32.mrf.mxu0
        %v1456 = vpop.f32.mrf.mxu0
        %v1457 = vadd.f32 0.0, %v1456
        %v1458 = vpop.f32.mrf.mxu0
        %1459 = vmatprep.mubr.bf16.mxu0 0
        %1460 = vmatmul.mubr.bf16.gmra.mxu0 %v847
        %v1461 = vpop.f32.mrf.mxu0
        %v1462 = vadd.f32 0.0, %v1461
        %v1463 = vpop.f32.mrf.mxu0
        %v1464 = vpop.f32.mrf.mxu0
        %v1465 = vadd.f32 0.0, %v1464
        %v1466 = vpop.f32.mrf.mxu0
        %1467 = vmatprep.mubr.bf16.mxu0 0
        %1468 = vmatmul.mubr.bf16.gmra.mxu0 %v850
        %v1469 = vpop.f32.mrf.mxu0
        %v1470 = vadd.f32 0.0, %v1469
        %v1471 = vpop.f32.mrf.mxu0
        %v1472 = vpop.f32.mrf.mxu0
        %v1473 = vadd.f32 0.0, %v1472
        %v1474 = vpop.f32.mrf.mxu0
        %1475 = vmatprep.mubr.bf16.mxu0 0
        %1476 = vmatmul.mubr.bf16.gmra.mxu0 %v853
        %v1477 = vpop.f32.mrf.mxu0
        %v1478 = vadd.f32 0.0, %v1477
        %v1479 = vpop.f32.mrf.mxu0
        %v1480 = vpop.f32.mrf.mxu0
        %v1481 = vadd.f32 0.0, %v1480
        %v1482 = vpop.f32.mrf.mxu0
        %1483 = vmatprep.mubr.bf16.mxu0 0
        %1484 = vmatmul.mubr.bf16.gmra.mxu0 %v1390
        %v1485 = vpop.f32.mrf.mxu0
        %v1486 = vadd.f32 0.0, %v1485
        %v1487 = vpop.f32.mrf.mxu0
        %v1488 = vpop.f32.mrf.mxu0
        %v1489 = vadd.f32 0.0, %v1488
        %v1490 = vpop.f32.mrf.mxu0
        %1491 = vdwg.mxu0
        %v1492 = vadd.f32 %v1360, %v1430
        %v1493 = vadd.f32 %v1361, %v1433
        %v1494 = vadd.f32 %v1362, %v1438
        %v1495 = vadd.f32 %v1363, %v1441
        %v1496 = vadd.f32 %v1364, %v1446
        %v1497 = vadd.f32 %v1365, %v1449
        %v1498 = vadd.f32 %v1366, %v1454
        %v1499 = vadd.f32 %v1367, %v1457
        %v1500 = vadd.f32 %v1368, %v1462
        %v1501 = vadd.f32 %v1369, %v1465
        %v1502 = vadd.f32 %v1370, %v1470
        %v1503 = vadd.f32 %v1371, %v1473
        %v1504 = vadd.f32 %v1372, %v1478
        %v1505 = vadd.f32 %v1373, %v1481
        %v1506 = vadd.f32 %v1374, %v1486
        %v1507 = vadd.f32 %v1375, %v1489
        %v1510 = vrot.slane %v718, 1
        %v1511 = vrot.slane %v728, 1
        %v1512 = vsel %vm1088, %v1510, %v1511
        %s1513 = scalar_lea.vmem %s2, 10
        %v1514 = vld [vmem:[%s1513] sm:$0x3]
        %v1516 = vsel %vm830, %v1512, 0
        %v1519 = vsel %vm855, %v1514, 0
        %1521 = vmatprep.subr.bf16.mxu0 0
        %1522 = vmatpush1.bf16.msra.mxu0 0
        %1523 = vmatprep.subr.bf16.mxu0 0
        %1524 = vmatpush1.bf16.msra.mxu0 0
        %1525 = vmatprep.subr.bf16.mxu0 0
        %1526 = vmatpush1.bf16.msra.mxu0 0
        %1527 = vmatprep.subr.bf16.mxu0 0
        %1528 = vmatpush1.bf16.msra.mxu0 0
        %1529 = vmatprep.subr.bf16.mxu0 0
        %1530 = vmatpush1.bf16.msra.mxu0 0
        %1531 = vmatprep.subr.bf16.mxu0 0
        %1532 = vmatpush1.bf16.msra.mxu0 0
        %1533 = vmatprep.subr.bf16.mxu0 0
        %1534 = vmatpush1.bf16.msra.mxu0 0
        %1535 = vmatprep.subr.bf16.mxu0 0
        %1536 = vmatpush1.bf16.msra.mxu0 %v1519
        %1537 = vmatprep.subr.bf16.mxu0 0
        %1538 = vmatpush2.bf16.msra.mxu0 0
        %1539 = vmatprep.subr.bf16.mxu0 0
        %1540 = vmatpush2.bf16.msra.mxu0 0
        %1541 = vmatprep.subr.bf16.mxu0 0
        %1542 = vmatpush2.bf16.msra.mxu0 0
        %1543 = vmatprep.subr.bf16.mxu0 0
        %1544 = vmatpush2.bf16.msra.mxu0 0
        %1545 = vmatprep.subr.bf16.mxu0 0
        %1546 = vmatpush2.bf16.msra.mxu0 0
        %1547 = vmatprep.subr.bf16.mxu0 0
        %1548 = vmatpush2.bf16.msra.mxu0 0
        %1549 = vmatprep.subr.bf16.mxu0 0
        %1550 = vmatpush2.bf16.msra.mxu0 0
        %1551 = vmatprep.subr.bf16.mxu0 0
        %1552 = vmatpush2.bf16.msra.mxu0 0
        %1553 = vmatprep.mubr.bf16.mxu0 0
        %1554 = vmatmul.mubr.bf16.gmra.mxu0 %v1119
        %v1555 = vpop.f32.mrf.mxu0
        %v1556 = vadd.f32 0.0, %v1555
        %v1557 = vpop.f32.mrf.mxu0
        %v1558 = vpop.f32.mrf.mxu0
        %v1559 = vadd.f32 0.0, %v1558
        %v1560 = vpop.f32.mrf.mxu0
        %1561 = vmatprep.mubr.bf16.mxu0 0
        %1562 = vmatmul.mubr.bf16.gmra.mxu0 %v1122
        %v1563 = vpop.f32.mrf.mxu0
        %v1564 = vadd.f32 0.0, %v1563
        %v1565 = vpop.f32.mrf.mxu0
        %v1566 = vpop.f32.mrf.mxu0
        %v1567 = vadd.f32 0.0, %v1566
        %v1568 = vpop.f32.mrf.mxu0
        %1569 = vmatprep.mubr.bf16.mxu0 0
        %1570 = vmatmul.mubr.bf16.gmra.mxu0 %v1125
        %v1571 = vpop.f32.mrf.mxu0
        %v1572 = vadd.f32 0.0, %v1571
        %v1573 = vpop.f32.mrf.mxu0
        %v1574 = vpop.f32.mrf.mxu0
        %v1575 = vadd.f32 0.0, %v1574
        %v1576 = vpop.f32.mrf.mxu0
        %1577 = vmatprep.mubr.bf16.mxu0 0
        %1578 = vmatmul.mubr.bf16.gmra.mxu0 %v1128
        %v1579 = vpop.f32.mrf.mxu0
        %v1580 = vadd.f32 0.0, %v1579
        %v1581 = vpop.f32.mrf.mxu0
        %v1582 = vpop.f32.mrf.mxu0
        %v1583 = vadd.f32 0.0, %v1582
        %v1584 = vpop.f32.mrf.mxu0
        %1585 = vmatprep.mubr.bf16.mxu0 0
        %1586 = vmatmul.mubr.bf16.gmra.mxu0 %v1131
        %v1587 = vpop.f32.mrf.mxu0
        %v1588 = vadd.f32 0.0, %v1587
        %v1589 = vpop.f32.mrf.mxu0
        %v1590 = vpop.f32.mrf.mxu0
        %v1591 = vadd.f32 0.0, %v1590
        %v1592 = vpop.f32.mrf.mxu0
        %1593 = vmatprep.mubr.bf16.mxu0 0
        %1594 = vmatmul.mubr.bf16.gmra.mxu0 %v1134
        %v1595 = vpop.f32.mrf.mxu0
        %v1596 = vadd.f32 0.0, %v1595
        %v1597 = vpop.f32.mrf.mxu0
        %v1598 = vpop.f32.mrf.mxu0
        %v1599 = vadd.f32 0.0, %v1598
        %v1600 = vpop.f32.mrf.mxu0
        %1601 = vmatprep.mubr.bf16.mxu0 0
        %1602 = vmatmul.mubr.bf16.gmra.mxu0 %v1137
        %v1603 = vpop.f32.mrf.mxu0
        %v1604 = vadd.f32 0.0, %v1603
        %v1605 = vpop.f32.mrf.mxu0
        %v1606 = vpop.f32.mrf.mxu0
        %v1607 = vadd.f32 0.0, %v1606
        %v1608 = vpop.f32.mrf.mxu0
        %1609 = vmatprep.mubr.bf16.mxu0 0
        %1610 = vmatmul.mubr.bf16.gmra.mxu0 %v1516
        %v1611 = vpop.f32.mrf.mxu0
        %v1612 = vadd.f32 0.0, %v1611
        %v1613 = vpop.f32.mrf.mxu0
        %v1614 = vpop.f32.mrf.mxu0
        %v1615 = vadd.f32 0.0, %v1614
        %v1616 = vpop.f32.mrf.mxu0
        %1617 = vdwg.mxu0
        %v1618 = vadd.f32 %v1492, %v1556
        %v1619 = vadd.f32 %v1493, %v1559
        %v1620 = vadd.f32 %v1494, %v1564
        %v1621 = vadd.f32 %v1495, %v1567
        %v1622 = vadd.f32 %v1496, %v1572
        %v1623 = vadd.f32 %v1497, %v1575
        %v1624 = vadd.f32 %v1498, %v1580
        %v1625 = vadd.f32 %v1499, %v1583
        %v1626 = vadd.f32 %v1500, %v1588
        %v1627 = vadd.f32 %v1501, %v1591
        %v1628 = vadd.f32 %v1502, %v1596
        %v1629 = vadd.f32 %v1503, %v1599
        %v1630 = vadd.f32 %v1504, %v1604
        %v1631 = vadd.f32 %v1505, %v1607
        %v1632 = vadd.f32 %v1506, %v1612
        %v1633 = vadd.f32 %v1507, %v1615
        %s1634 = scalar_lea.vmem %s2, 12
        %v1635 = vld [vmem:[%s1634] sm:$0x3]
        %v1637 = vsel %vm830, %v719, 0
        %v1640 = vsel %vm855, %v1635, 0
        %1642 = vmatprep.subr.bf16.mxu0 0
        %1643 = vmatpush1.bf16.msra.mxu0 0
        %1644 = vmatprep.subr.bf16.mxu0 0
        %1645 = vmatpush1.bf16.msra.mxu0 0
        %1646 = vmatprep.subr.bf16.mxu0 0
        %1647 = vmatpush1.bf16.msra.mxu0 0
        %1648 = vmatprep.subr.bf16.mxu0 0
        %1649 = vmatpush1.bf16.msra.mxu0 0
        %1650 = vmatprep.subr.bf16.mxu0 0
        %1651 = vmatpush1.bf16.msra.mxu0 0
        %1652 = vmatprep.subr.bf16.mxu0 0
        %1653 = vmatpush1.bf16.msra.mxu0 0
        %1654 = vmatprep.subr.bf16.mxu0 0
        %1655 = vmatpush1.bf16.msra.mxu0 0
        %1656 = vmatprep.subr.bf16.mxu0 0
        %1657 = vmatpush1.bf16.msra.mxu0 %v1640
        %1658 = vmatprep.subr.bf16.mxu0 0
        %1659 = vmatpush2.bf16.msra.mxu0 0
        %1660 = vmatprep.subr.bf16.mxu0 0
        %1661 = vmatpush2.bf16.msra.mxu0 0
        %1662 = vmatprep.subr.bf16.mxu0 0
        %1663 = vmatpush2.bf16.msra.mxu0 0
        %1664 = vmatprep.subr.bf16.mxu0 0
        %1665 = vmatpush2.bf16.msra.mxu0 0
        %1666 = vmatprep.subr.bf16.mxu0 0
        %1667 = vmatpush2.bf16.msra.mxu0 0
        %1668 = vmatprep.subr.bf16.mxu0 0
        %1669 = vmatpush2.bf16.msra.mxu0 0
        %1670 = vmatprep.subr.bf16.mxu0 0
        %1671 = vmatpush2.bf16.msra.mxu0 0
        %1672 = vmatprep.subr.bf16.mxu0 0
        %1673 = vmatpush2.bf16.msra.mxu0 0
        %1674 = vmatprep.mubr.bf16.mxu0 0
        %1675 = vmatmul.mubr.bf16.gmra.mxu0 %v960
        %v1676 = vpop.f32.mrf.mxu0
        %v1677 = vadd.f32 0.0, %v1676
        %v1678 = vpop.f32.mrf.mxu0
        %v1679 = vpop.f32.mrf.mxu0
        %v1680 = vadd.f32 0.0, %v1679
        %v1681 = vpop.f32.mrf.mxu0
        %1682 = vmatprep.mubr.bf16.mxu0 0
        %1683 = vmatmul.mubr.bf16.gmra.mxu0 %v962
        %v1684 = vpop.f32.mrf.mxu0
        %v1685 = vadd.f32 0.0, %v1684
        %v1686 = vpop.f32.mrf.mxu0
        %v1687 = vpop.f32.mrf.mxu0
        %v1688 = vadd.f32 0.0, %v1687
        %v1689 = vpop.f32.mrf.mxu0
        %1690 = vmatprep.mubr.bf16.mxu0 0
        %1691 = vmatmul.mubr.bf16.gmra.mxu0 %v964
        %v1692 = vpop.f32.mrf.mxu0
        %v1693 = vadd.f32 0.0, %v1692
        %v1694 = vpop.f32.mrf.mxu0
        %v1695 = vpop.f32.mrf.mxu0
        %v1696 = vadd.f32 0.0, %v1695
        %v1697 = vpop.f32.mrf.mxu0
        %1698 = vmatprep.mubr.bf16.mxu0 0
        %1699 = vmatmul.mubr.bf16.gmra.mxu0 %v966
        %v1700 = vpop.f32.mrf.mxu0
        %v1701 = vadd.f32 0.0, %v1700
        %v1702 = vpop.f32.mrf.mxu0
        %v1703 = vpop.f32.mrf.mxu0
        %v1704 = vadd.f32 0.0, %v1703
        %v1705 = vpop.f32.mrf.mxu0
        %1706 = vmatprep.mubr.bf16.mxu0 0
        %1707 = vmatmul.mubr.bf16.gmra.mxu0 %v968
        %v1708 = vpop.f32.mrf.mxu0
        %v1709 = vadd.f32 0.0, %v1708
        %v1710 = vpop.f32.mrf.mxu0
        %v1711 = vpop.f32.mrf.mxu0
        %v1712 = vadd.f32 0.0, %v1711
        %v1713 = vpop.f32.mrf.mxu0
        %1714 = vmatprep.mubr.bf16.mxu0 0
        %1715 = vmatmul.mubr.bf16.gmra.mxu0 %v970
        %v1716 = vpop.f32.mrf.mxu0
        %v1717 = vadd.f32 0.0, %v1716
        %v1718 = vpop.f32.mrf.mxu0
        %v1719 = vpop.f32.mrf.mxu0
        %v1720 = vadd.f32 0.0, %v1719
        %v1721 = vpop.f32.mrf.mxu0
        %1722 = vmatprep.mubr.bf16.mxu0 0
        %1723 = vmatmul.mubr.bf16.gmra.mxu0 %v1258
        %v1724 = vpop.f32.mrf.mxu0
        %v1725 = vadd.f32 0.0, %v1724
        %v1726 = vpop.f32.mrf.mxu0
        %v1727 = vpop.f32.mrf.mxu0
        %v1728 = vadd.f32 0.0, %v1727
        %v1729 = vpop.f32.mrf.mxu0
        %1730 = vmatprep.mubr.bf16.mxu0 0
        %1731 = vmatmul.mubr.bf16.gmra.mxu0 %v1637
        %v1732 = vpop.f32.mrf.mxu0
        %v1733 = vadd.f32 0.0, %v1732
        %v1734 = vpop.f32.mrf.mxu0
        %v1735 = vpop.f32.mrf.mxu0
        %v1736 = vadd.f32 0.0, %v1735
        %v1737 = vpop.f32.mrf.mxu0
        %1738 = vdwg.mxu0
        %v1739 = vadd.f32 %v1618, %v1677
        %v1740 = vadd.f32 %v1619, %v1680
        %v1741 = vadd.f32 %v1620, %v1685
        %v1742 = vadd.f32 %v1621, %v1688
        %v1743 = vadd.f32 %v1622, %v1693
        %v1744 = vadd.f32 %v1623, %v1696
        %v1745 = vadd.f32 %v1624, %v1701
        %v1746 = vadd.f32 %v1625, %v1704
        %v1747 = vadd.f32 %v1626, %v1709
        %v1748 = vadd.f32 %v1627, %v1712
        %v1749 = vadd.f32 %v1628, %v1717
        %v1750 = vadd.f32 %v1629, %v1720
        %v1751 = vadd.f32 %v1630, %v1725
        %v1752 = vadd.f32 %v1631, %v1728
        %v1753 = vadd.f32 %v1632, %v1733
        %v1754 = vadd.f32 %v1633, %v1736
        %v1755 = vshrl.u32 %v719, 16
        %v1757 = vshll.u32 %v719, 16
        %v1759 = vrot.slane %v1757, 1
        %v1760 = vor.u32 %v1755, %v1759
        %v1762 = vshll.u32 %v729, 16
        %v1764 = vrot.slane %v1762, 1
        %v1765 = vsel %vm731, %v1760, %v1764
        %s1766 = scalar_lea.vmem %s2, 14
        %v1767 = vld [vmem:[%s1766] sm:$0x3]
        %v1769 = vsel %vm830, %v1765, 0
        %v1772 = vsel %vm855, %v1767, 0
        %1774 = vmatprep.subr.bf16.mxu0 0
        %1775 = vmatpush1.bf16.msra.mxu0 0
        %1776 = vmatprep.subr.bf16.mxu0 0
        %1777 = vmatpush1.bf16.msra.mxu0 0
        %1778 = vmatprep.subr.bf16.mxu0 0
        %1779 = vmatpush1.bf16.msra.mxu0 0
        %1780 = vmatprep.subr.bf16.mxu0 0
        %1781 = vmatpush1.bf16.msra.mxu0 0
        %1782 = vmatprep.subr.bf16.mxu0 0
        %1783 = vmatpush1.bf16.msra.mxu0 0
        %1784 = vmatprep.subr.bf16.mxu0 0
        %1785 = vmatpush1.bf16.msra.mxu0 0
        %1786 = vmatprep.subr.bf16.mxu0 0
        %1787 = vmatpush1.bf16.msra.mxu0 0
        %1788 = vmatprep.subr.bf16.mxu0 0
        %1789 = vmatpush1.bf16.msra.mxu0 %v1772
        %1790 = vmatprep.subr.bf16.mxu0 0
        %1791 = vmatpush2.bf16.msra.mxu0 0
        %1792 = vmatprep.subr.bf16.mxu0 0
        %1793 = vmatpush2.bf16.msra.mxu0 0
        %1794 = vmatprep.subr.bf16.mxu0 0
        %1795 = vmatpush2.bf16.msra.mxu0 0
        %1796 = vmatprep.subr.bf16.mxu0 0
        %1797 = vmatpush2.bf16.msra.mxu0 0
        %1798 = vmatprep.subr.bf16.mxu0 0
        %1799 = vmatpush2.bf16.msra.mxu0 0
        %1800 = vmatprep.subr.bf16.mxu0 0
        %1801 = vmatpush2.bf16.msra.mxu0 0
        %1802 = vmatprep.subr.bf16.mxu0 0
        %1803 = vmatpush2.bf16.msra.mxu0 0
        %1804 = vmatprep.subr.bf16.mxu0 0
        %1805 = vmatpush2.bf16.msra.mxu0 0
        %1806 = vmatprep.mubr.bf16.mxu0 0
        %1807 = vmatmul.mubr.bf16.gmra.mxu0 %v838
        %v1808 = vpop.f32.mrf.mxu0
        %v1809 = vadd.f32 0.0, %v1808
        %v1810 = vpop.f32.mrf.mxu0
        %v1811 = vpop.f32.mrf.mxu0
        %v1812 = vadd.f32 0.0, %v1811
        %v1813 = vpop.f32.mrf.mxu0
        %1814 = vmatprep.mubr.bf16.mxu0 0
        %1815 = vmatmul.mubr.bf16.gmra.mxu0 %v841
        %v1816 = vpop.f32.mrf.mxu0
        %v1817 = vadd.f32 0.0, %v1816
        %v1818 = vpop.f32.mrf.mxu0
        %v1819 = vpop.f32.mrf.mxu0
        %v1820 = vadd.f32 0.0, %v1819
        %v1821 = vpop.f32.mrf.mxu0
        %1822 = vmatprep.mubr.bf16.mxu0 0
        %1823 = vmatmul.mubr.bf16.gmra.mxu0 %v844
        %v1824 = vpop.f32.mrf.mxu0
        %v1825 = vadd.f32 0.0, %v1824
        %v1826 = vpop.f32.mrf.mxu0
        %v1827 = vpop.f32.mrf.mxu0
        %v1828 = vadd.f32 0.0, %v1827
        %v1829 = vpop.f32.mrf.mxu0
        %1830 = vmatprep.mubr.bf16.mxu0 0
        %1831 = vmatmul.mubr.bf16.gmra.mxu0 %v847
        %v1832 = vpop.f32.mrf.mxu0
        %v1833 = vadd.f32 0.0, %v1832
        %v1834 = vpop.f32.mrf.mxu0
        %v1835 = vpop.f32.mrf.mxu0
        %v1836 = vadd.f32 0.0, %v1835
        %v1837 = vpop.f32.mrf.mxu0
        %1838 = vmatprep.mubr.bf16.mxu0 0
        %1839 = vmatmul.mubr.bf16.gmra.mxu0 %v850
        %v1840 = vpop.f32.mrf.mxu0
        %v1841 = vadd.f32 0.0, %v1840
        %v1842 = vpop.f32.mrf.mxu0
        %v1843 = vpop.f32.mrf.mxu0
        %v1844 = vadd.f32 0.0, %v1843
        %v1845 = vpop.f32.mrf.mxu0
        %1846 = vmatprep.mubr.bf16.mxu0 0
        %1847 = vmatmul.mubr.bf16.gmra.mxu0 %v853
        %v1848 = vpop.f32.mrf.mxu0
        %v1849 = vadd.f32 0.0, %v1848
        %v1850 = vpop.f32.mrf.mxu0
        %v1851 = vpop.f32.mrf.mxu0
        %v1852 = vadd.f32 0.0, %v1851
        %v1853 = vpop.f32.mrf.mxu0
        %1854 = vmatprep.mubr.bf16.mxu0 0
        %1855 = vmatmul.mubr.bf16.gmra.mxu0 %v1390
        %v1856 = vpop.f32.mrf.mxu0
        %v1857 = vadd.f32 0.0, %v1856
        %v1858 = vpop.f32.mrf.mxu0
        %v1859 = vpop.f32.mrf.mxu0
        %v1860 = vadd.f32 0.0, %v1859
        %v1861 = vpop.f32.mrf.mxu0
        %1862 = vmatprep.mubr.bf16.mxu0 0
        %1863 = vmatmul.mubr.bf16.gmra.mxu0 %v1769
        %v1864 = vpop.f32.mrf.mxu0
        %v1865 = vadd.f32 0.0, %v1864
        %v1866 = vpop.f32.mrf.mxu0
        %v1867 = vpop.f32.mrf.mxu0
        %v1868 = vadd.f32 0.0, %v1867
        %v1869 = vpop.f32.mrf.mxu0
        %1870 = vdwg.mxu0
        %v1871 = vadd.f32 %v1739, %v1809
        %v1872 = vadd.f32 %v1740, %v1812
        %v1873 = vadd.f32 %v1741, %v1817
        %v1874 = vadd.f32 %v1742, %v1820
        %v1875 = vadd.f32 %v1743, %v1825
        %v1876 = vadd.f32 %v1744, %v1828
        %v1877 = vadd.f32 %v1745, %v1833
        %v1878 = vadd.f32 %v1746, %v1836
        %v1879 = vadd.f32 %v1747, %v1841
        %v1880 = vadd.f32 %v1748, %v1844
        %v1881 = vadd.f32 %v1749, %v1849
        %v1882 = vadd.f32 %v1750, %v1852
        %v1883 = vadd.f32 %v1751, %v1857
        %v1884 = vadd.f32 %v1752, %v1860
        %v1885 = vadd.f32 %v1753, %v1865
        %v1886 = vadd.f32 %v1754, %v1868
        %v1889 = vrot.slane %v719, 1
        %v1890 = vrot.slane %v729, 1
        %v1891 = vsel %vm1088, %v1889, %v1890
        %s1892 = scalar_lea.vmem %s2, 16
        %v1893 = vld [vmem:[%s1892] sm:$0x3]
        %v1895 = vsel %vm830, %v1891, 0
        %v1898 = vsel %vm855, %v1893, 0
        %1900 = vmatprep.subr.bf16.mxu0 0
        %1901 = vmatpush1.bf16.msra.mxu0 0
        %1902 = vmatprep.subr.bf16.mxu0 0
        %1903 = vmatpush1.bf16.msra.mxu0 0
        %1904 = vmatprep.subr.bf16.mxu0 0
        %1905 = vmatpush1.bf16.msra.mxu0 0
        %1906 = vmatprep.subr.bf16.mxu0 0
        %1907 = vmatpush1.bf16.msra.mxu0 0
        %1908 = vmatprep.subr.bf16.mxu0 0
        %1909 = vmatpush1.bf16.msra.mxu0 0
        %1910 = vmatprep.subr.bf16.mxu0 0
        %1911 = vmatpush1.bf16.msra.mxu0 0
        %1912 = vmatprep.subr.bf16.mxu0 0
        %1913 = vmatpush1.bf16.msra.mxu0 0
        %1914 = vmatprep.subr.bf16.mxu0 0
        %1915 = vmatpush1.bf16.msra.mxu0 %v1898
        %1916 = vmatprep.subr.bf16.mxu0 0
        %1917 = vmatpush2.bf16.msra.mxu0 0
        %1918 = vmatprep.subr.bf16.mxu0 0
        %1919 = vmatpush2.bf16.msra.mxu0 0
        %1920 = vmatprep.subr.bf16.mxu0 0
        %1921 = vmatpush2.bf16.msra.mxu0 0
        %1922 = vmatprep.subr.bf16.mxu0 0
        %1923 = vmatpush2.bf16.msra.mxu0 0
        %1924 = vmatprep.subr.bf16.mxu0 0
        %1925 = vmatpush2.bf16.msra.mxu0 0
        %1926 = vmatprep.subr.bf16.mxu0 0
        %1927 = vmatpush2.bf16.msra.mxu0 0
        %1928 = vmatprep.subr.bf16.mxu0 0
        %1929 = vmatpush2.bf16.msra.mxu0 0
        %1930 = vmatprep.subr.bf16.mxu0 0
        %1931 = vmatpush2.bf16.msra.mxu0 0
        %1932 = vmatprep.mubr.bf16.mxu0 0
        %1933 = vmatmul.mubr.bf16.gmra.mxu0 %v1122
        %v1934 = vpop.f32.mrf.mxu0
        %v1935 = vadd.f32 0.0, %v1934
        %v1936 = vpop.f32.mrf.mxu0
        %v1937 = vpop.f32.mrf.mxu0
        %v1938 = vadd.f32 0.0, %v1937
        %v1939 = vpop.f32.mrf.mxu0
        %1940 = vmatprep.mubr.bf16.mxu0 0
        %1941 = vmatmul.mubr.bf16.gmra.mxu0 %v1125
        %v1942 = vpop.f32.mrf.mxu0
        %v1943 = vadd.f32 0.0, %v1942
        %v1944 = vpop.f32.mrf.mxu0
        %v1945 = vpop.f32.mrf.mxu0
        %v1946 = vadd.f32 0.0, %v1945
        %v1947 = vpop.f32.mrf.mxu0
        %1948 = vmatprep.mubr.bf16.mxu0 0
        %1949 = vmatmul.mubr.bf16.gmra.mxu0 %v1128
        %v1950 = vpop.f32.mrf.mxu0
        %v1951 = vadd.f32 0.0, %v1950
        %v1952 = vpop.f32.mrf.mxu0
        %v1953 = vpop.f32.mrf.mxu0
        %v1954 = vadd.f32 0.0, %v1953
        %v1955 = vpop.f32.mrf.mxu0
        %1956 = vmatprep.mubr.bf16.mxu0 0
        %1957 = vmatmul.mubr.bf16.gmra.mxu0 %v1131
        %v1958 = vpop.f32.mrf.mxu0
        %v1959 = vadd.f32 0.0, %v1958
        %v1960 = vpop.f32.mrf.mxu0
        %v1961 = vpop.f32.mrf.mxu0
        %v1962 = vadd.f32 0.0, %v1961
        %v1963 = vpop.f32.mrf.mxu0
        %1964 = vmatprep.mubr.bf16.mxu0 0
        %1965 = vmatmul.mubr.bf16.gmra.mxu0 %v1134
        %v1966 = vpop.f32.mrf.mxu0
        %v1967 = vadd.f32 0.0, %v1966
        %v1968 = vpop.f32.mrf.mxu0
        %v1969 = vpop.f32.mrf.mxu0
        %v1970 = vadd.f32 0.0, %v1969
        %v1971 = vpop.f32.mrf.mxu0
        %1972 = vmatprep.mubr.bf16.mxu0 0
        %1973 = vmatmul.mubr.bf16.gmra.mxu0 %v1137
        %v1974 = vpop.f32.mrf.mxu0
        %v1975 = vadd.f32 0.0, %v1974
        %v1976 = vpop.f32.mrf.mxu0
        %v1977 = vpop.f32.mrf.mxu0
        %v1978 = vadd.f32 0.0, %v1977
        %v1979 = vpop.f32.mrf.mxu0
        %1980 = vmatprep.mubr.bf16.mxu0 0
        %1981 = vmatmul.mubr.bf16.gmra.mxu0 %v1516
        %v1982 = vpop.f32.mrf.mxu0
        %v1983 = vadd.f32 0.0, %v1982
        %v1984 = vpop.f32.mrf.mxu0
        %v1985 = vpop.f32.mrf.mxu0
        %v1986 = vadd.f32 0.0, %v1985
        %v1987 = vpop.f32.mrf.mxu0
        %1988 = vmatprep.mubr.bf16.mxu0 0
        %1989 = vmatmul.mubr.bf16.gmra.mxu0 %v1895
        %v1990 = vpop.f32.mrf.mxu0
        %v1991 = vadd.f32 0.0, %v1990
        %v1992 = vpop.f32.mrf.mxu0
        %v1993 = vpop.f32.mrf.mxu0
        %v1994 = vadd.f32 0.0, %v1993
        %v1995 = vpop.f32.mrf.mxu0
        %1996 = vdwg.mxu0
        %v1997 = vadd.f32 %v1871, %v1935
        %v1998 = vadd.f32 %v1872, %v1938
        %v1999 = vadd.f32 %v1873, %v1943
        %v2000 = vadd.f32 %v1874, %v1946
        %v2001 = vadd.f32 %v1875, %v1951
        %v2002 = vadd.f32 %v1876, %v1954
        %v2003 = vadd.f32 %v1877, %v1959
        %v2004 = vadd.f32 %v1878, %v1962
        %v2005 = vadd.f32 %v1879, %v1967
        %v2006 = vadd.f32 %v1880, %v1970
        %v2007 = vadd.f32 %v1881, %v1975
        %v2008 = vadd.f32 %v1882, %v1978
        %v2009 = vadd.f32 %v1883, %v1983
        %v2010 = vadd.f32 %v1884, %v1986
        %v2011 = vadd.f32 %v1885, %v1991
        %v2012 = vadd.f32 %v1886, %v1994
        %v2013 = vld [vmem:[%s5] sm:$0x1]
        %v2015 = vlaneseq
        %v2016 = vshrl.u32 %v2015, 7
        %v2017 = vsub.s32 0, %v2016
        %v2018 = vrot.slane %v2013, %v2017
        %v2020 = vadd.f32 %v1997, %v2018
        %v2021 = vadd.f32 %v1998, %v2018
        %v2022 = vadd.f32 %v1999, %v2018
        %v2023 = vadd.f32 %v2000, %v2018
        %v2024 = vadd.f32 %v2001, %v2018
        %v2025 = vadd.f32 %v2002, %v2018
        %v2026 = vadd.f32 %v2003, %v2018
        %v2027 = vadd.f32 %v2004, %v2018
        %v2028 = vadd.f32 %v2005, %v2018
        %v2029 = vadd.f32 %v2006, %v2018
        %v2030 = vadd.f32 %v2007, %v2018
        %v2031 = vadd.f32 %v2008, %v2018
        %v2032 = vadd.f32 %v2009, %v2018
        %v2033 = vadd.f32 %v2010, %v2018
        %v2034 = vadd.f32 %v2011, %v2018
        %v2035 = vadd.f32 %v2012, %v2018
        %v2036 = vmax.f32 %v2020, 0.0
        %v2037 = vmax.f32 %v2021, 0.0
        %v2038 = vmax.f32 %v2022, 0.0
        %v2039 = vmax.f32 %v2023, 0.0
        %v2040 = vmax.f32 %v2024, 0.0
        %v2041 = vmax.f32 %v2025, 0.0
        %v2042 = vmax.f32 %v2026, 0.0
        %v2043 = vmax.f32 %v2027, 0.0
        %v2044 = vmax.f32 %v2028, 0.0
        %v2045 = vmax.f32 %v2029, 0.0
        %v2046 = vmax.f32 %v2030, 0.0
        %v2047 = vmax.f32 %v2031, 0.0
        %v2048 = vmax.f32 %v2032, 0.0
        %v2049 = vmax.f32 %v2033, 0.0
        %v2050 = vmax.f32 %v2034, 0.0
        %v2051 = vmax.f32 %v2035, 0.0
        %v2052 = vpack.c.bf16 %v2037, %v2036
        %v2053 = vpack.c.bf16 %v2039, %v2038
        %v2054 = vpack.c.bf16 %v2041, %v2040
        %v2055 = vpack.c.bf16 %v2043, %v2042
        %v2056 = vpack.c.bf16 %v2045, %v2044
        %v2057 = vpack.c.bf16 %v2047, %v2046
        %v2058 = vpack.c.bf16 %v2049, %v2048
        %v2059 = vpack.c.bf16 %v2051, %v2050
        %v2060 = vld [vmem:[%s3] sm:$0x3]
        %v2061 = vld [vmem:[%s6] sm:$0x1]
        %v2063 = vlaneseq
        %v2064 = vshrl.u32 %v2063, 7
        %v2065 = vsub.s32 0, %v2064
        %v2066 = vrot.slane %v2061, %v2065
        %v2069 = vsel %vm830, %v2052, 0
        %v2072 = vsel %vm830, %v2053, 0
        %v2075 = vsel %vm830, %v2054, 0
        %v2078 = vsel %vm830, %v2055, 0
        %v2081 = vsel %vm830, %v2056, 0
        %v2084 = vsel %vm830, %v2057, 0
        %v2087 = vsel %vm830, %v2058, 0
        %v2090 = vsel %vm830, %v2059, 0
        %v2093 = vsel %vm855, %v2060, 0
        %2095 = vmatprep.subr.bf16.mxu0 0
        %2096 = vmatpush1.bf16.msra.mxu0 0
        %2097 = vmatprep.subr.bf16.mxu0 0
        %2098 = vmatpush1.bf16.msra.mxu0 0
        %2099 = vmatprep.subr.bf16.mxu0 0
        %2100 = vmatpush1.bf16.msra.mxu0 0
        %2101 = vmatprep.subr.bf16.mxu0 0
        %2102 = vmatpush1.bf16.msra.mxu0 0
        %2103 = vmatprep.subr.bf16.mxu0 0
        %2104 = vmatpush1.bf16.msra.mxu0 0
        %2105 = vmatprep.subr.bf16.mxu0 0
        %2106 = vmatpush1.bf16.msra.mxu0 0
        %2107 = vmatprep.subr.bf16.mxu0 0
        %2108 = vmatpush1.bf16.msra.mxu0 0
        %2109 = vmatprep.subr.bf16.mxu0 0
        %2110 = vmatpush1.bf16.msra.mxu0 %v2093
        %2111 = vmatprep.subr.bf16.mxu0 0
        %2112 = vmatpush2.bf16.msra.mxu0 0
        %2113 = vmatprep.subr.bf16.mxu0 0
        %2114 = vmatpush2.bf16.msra.mxu0 0
        %2115 = vmatprep.subr.bf16.mxu0 0
        %2116 = vmatpush2.bf16.msra.mxu0 0
        %2117 = vmatprep.subr.bf16.mxu0 0
        %2118 = vmatpush2.bf16.msra.mxu0 0
        %2119 = vmatprep.subr.bf16.mxu0 0
        %2120 = vmatpush2.bf16.msra.mxu0 0
        %2121 = vmatprep.subr.bf16.mxu0 0
        %2122 = vmatpush2.bf16.msra.mxu0 0
        %2123 = vmatprep.subr.bf16.mxu0 0
        %2124 = vmatpush2.bf16.msra.mxu0 0
        %2125 = vmatprep.subr.bf16.mxu0 0
        %2126 = vmatpush2.bf16.msra.mxu0 0
        %2127 = vmatprep.mubr.bf16.mxu0 0
        %2128 = vmatmul.mubr.bf16.gmra.mxu0 %v2069
        %v2129 = vpop.f32.mrf.mxu0
        %v2130 = vadd.f32 %v2066, %v2129
        %v2131 = vpop.f32.mrf.mxu0
        %v2132 = vpop.f32.mrf.mxu0
        %v2133 = vadd.f32 %v2066, %v2132
        %v2134 = vpop.f32.mrf.mxu0
        %2135 = vmatprep.mubr.bf16.mxu0 0
        %2136 = vmatmul.mubr.bf16.gmra.mxu0 %v2072
        %v2137 = vpop.f32.mrf.mxu0
        %v2138 = vadd.f32 %v2066, %v2137
        %v2139 = vpop.f32.mrf.mxu0
        %v2140 = vpop.f32.mrf.mxu0
        %v2141 = vadd.f32 %v2066, %v2140
        %v2142 = vpop.f32.mrf.mxu0
        %2143 = vmatprep.mubr.bf16.mxu0 0
        %2144 = vmatmul.mubr.bf16.gmra.mxu0 %v2075
        %v2145 = vpop.f32.mrf.mxu0
        %v2146 = vadd.f32 %v2066, %v2145
        %v2147 = vpop.f32.mrf.mxu0
        %v2148 = vpop.f32.mrf.mxu0
        %v2149 = vadd.f32 %v2066, %v2148
        %v2150 = vpop.f32.mrf.mxu0
        %2151 = vmatprep.mubr.bf16.mxu0 0
        %2152 = vmatmul.mubr.bf16.gmra.mxu0 %v2078
        %v2153 = vpop.f32.mrf.mxu0
        %v2154 = vadd.f32 %v2066, %v2153
        %v2155 = vpop.f32.mrf.mxu0
        %v2156 = vpop.f32.mrf.mxu0
        %v2157 = vadd.f32 %v2066, %v2156
        %v2158 = vpop.f32.mrf.mxu0
        %2159 = vmatprep.mubr.bf16.mxu0 0
        %2160 = vmatmul.mubr.bf16.gmra.mxu0 %v2081
        %v2161 = vpop.f32.mrf.mxu0
        %v2162 = vadd.f32 %v2066, %v2161
        %v2163 = vpop.f32.mrf.mxu0
        %v2164 = vpop.f32.mrf.mxu0
        %v2165 = vadd.f32 %v2066, %v2164
        %v2166 = vpop.f32.mrf.mxu0
        %2167 = vmatprep.mubr.bf16.mxu0 0
        %2168 = vmatmul.mubr.bf16.gmra.mxu0 %v2084
        %v2169 = vpop.f32.mrf.mxu0
        %v2170 = vadd.f32 %v2066, %v2169
        %v2171 = vpop.f32.mrf.mxu0
        %v2172 = vpop.f32.mrf.mxu0
        %v2173 = vadd.f32 %v2066, %v2172
        %v2174 = vpop.f32.mrf.mxu0
        %2175 = vmatprep.mubr.bf16.mxu0 0
        %2176 = vmatmul.mubr.bf16.gmra.mxu0 %v2087
        %v2177 = vpop.f32.mrf.mxu0
        %v2178 = vadd.f32 %v2066, %v2177
        %v2179 = vpop.f32.mrf.mxu0
        %v2180 = vpop.f32.mrf.mxu0
        %v2181 = vadd.f32 %v2066, %v2180
        %v2182 = vpop.f32.mrf.mxu0
        %2183 = vmatprep.mubr.bf16.mxu0 0
        %2184 = vmatmul.mubr.bf16.gmra.mxu0 %v2090
        %v2185 = vpop.f32.mrf.mxu0
        %v2186 = vadd.f32 %v2066, %v2185
        %v2187 = vpop.f32.mrf.mxu0
        %v2188 = vpop.f32.mrf.mxu0
        %v2189 = vadd.f32 %v2066, %v2188
        %v2190 = vpop.f32.mrf.mxu0
        %2191 = vdwg.mxu0
        %s2192 = sadd.s32 %s293, 1
        %s2193 = smul.u32 %s2192, 2
        %s2194 = smul.addr %s2193, 4
        %s2195 = scalar_lea.vmem %s290, %s2194
        %v2196 = vld [vmem:[%s2195] sm:$0xf]
        %v2197 = vld [vmem:[%s2195 + $0x4] sm:$0xf]
        %v2198 = vld [vmem:[%s2195 + $0x8] sm:$0xf]
        %v2199 = vld [vmem:[%s2195 + $0xc] sm:$0xf]
        %v2200 = vld [vmem:[%s2195 + $0x10] sm:$0xf]
        %v2201 = vld [vmem:[%s2195 + $0x14] sm:$0xf]
        %v2202 = vld [vmem:[%s2195 + $0x18] sm:$0xf]
        %v2203 = vld [vmem:[%s2195 + $0x1c] sm:$0xf]
        %v2204 = vld [vmem:[%s2195 + $0x20] sm:$0xf]
        %v2205 = vld [vmem:[%s2195 + $0x24] sm:$0xf]
        %v2206 = vld [vmem:[%s2195 + $0x28] sm:$0xf]
        %v2207 = vld [vmem:[%s2195 + $0x2c] sm:$0xf]
        %v2208 = vld [vmem:[%s2195 + $0x30] sm:$0xf]
        %v2209 = vld [vmem:[%s2195 + $0x34] sm:$0xf]
        %v2210 = vld [vmem:[%s2195 + $0x38] sm:$0xf]
        %v2211 = vld [vmem:[%s2195 + $0x3c] sm:$0xf]
        %v2212 = vunpack.c.l.bf16 %v2196
        %v2213 = vunpack.c.l.bf16 %v2197
        %v2214 = vunpack.c.l.bf16 %v2198
        %v2215 = vunpack.c.l.bf16 %v2199
        %v2216 = vunpack.c.l.bf16 %v2200
        %v2217 = vunpack.c.l.bf16 %v2201
        %v2218 = vunpack.c.l.bf16 %v2202
        %v2219 = vunpack.c.l.bf16 %v2203
        %v2220 = vunpack.c.l.bf16 %v2204
        %v2221 = vunpack.c.l.bf16 %v2205
        %v2222 = vunpack.c.l.bf16 %v2206
        %v2223 = vunpack.c.l.bf16 %v2207
        %v2224 = vunpack.c.l.bf16 %v2208
        %v2225 = vunpack.c.l.bf16 %v2209
        %v2226 = vunpack.c.l.bf16 %v2210
        %v2227 = vunpack.c.l.bf16 %v2211
        %v2228 = vadd.f32 %v2130, %v2212
        %v2229 = vadd.f32 %v2133, %v2213
        %v2230 = vadd.f32 %v2138, %v2214
        %v2231 = vadd.f32 %v2141, %v2215
        %v2232 = vadd.f32 %v2146, %v2216
        %v2233 = vadd.f32 %v2149, %v2217
        %v2234 = vadd.f32 %v2154, %v2218
        %v2235 = vadd.f32 %v2157, %v2219
        %v2236 = vadd.f32 %v2162, %v2220
        %v2237 = vadd.f32 %v2165, %v2221
        %v2238 = vadd.f32 %v2170, %v2222
        %v2239 = vadd.f32 %v2173, %v2223
        %v2240 = vadd.f32 %v2178, %v2224
        %v2241 = vadd.f32 %v2181, %v2225
        %v2242 = vadd.f32 %v2186, %v2226
        %v2243 = vadd.f32 %v2189, %v2227
        %v2244 = vmax.f32 %v2228, 0.0
        %v2245 = vmax.f32 %v2229, 0.0
        %v2246 = vmax.f32 %v2230, 0.0
        %v2247 = vmax.f32 %v2231, 0.0
        %v2248 = vmax.f32 %v2232, 0.0
        %v2249 = vmax.f32 %v2233, 0.0
        %v2250 = vmax.f32 %v2234, 0.0
        %v2251 = vmax.f32 %v2235, 0.0
        %v2252 = vmax.f32 %v2236, 0.0
        %v2253 = vmax.f32 %v2237, 0.0
        %v2254 = vmax.f32 %v2238, 0.0
        %v2255 = vmax.f32 %v2239, 0.0
        %v2256 = vmax.f32 %v2240, 0.0
        %v2257 = vmax.f32 %v2241, 0.0
        %v2258 = vmax.f32 %v2242, 0.0
        %v2259 = vmax.f32 %v2243, 0.0
        %2260 = vst.msk [vmem:[%s285] sm:$0xff] %vm382, %v2244
        %2261 = vst.msk [vmem:[%s285 + $0x8] sm:$0xff] %vm382, %v2245
        %2262 = vst.msk [vmem:[%s285 + $0x10] sm:$0xff] %vm382, %v2246
        %2263 = vst.msk [vmem:[%s285 + $0x18] sm:$0xff] %vm382, %v2247
        %2264 = vst.msk [vmem:[%s285 + $0x20] sm:$0xff] %vm382, %v2248
        %2265 = vst.msk [vmem:[%s285 + $0x28] sm:$0xff] %vm382, %v2249
        %2266 = vst.msk [vmem:[%s285 + $0x30] sm:$0xff] %vm382, %v2250
        %2267 = vst.msk [vmem:[%s285 + $0x38] sm:$0xff] %vm382, %v2251
        %2268 = vst.msk [vmem:[%s285 + $0x40] sm:$0xff] %vm382, %v2252
        %2269 = vst.msk [vmem:[%s285 + $0x48] sm:$0xff] %vm382, %v2253
        %2270 = vst.msk [vmem:[%s285 + $0x50] sm:$0xff] %vm382, %v2254
        %2271 = vst.msk [vmem:[%s285 + $0x58] sm:$0xff] %vm382, %v2255
        %2272 = vst.msk [vmem:[%s285 + $0x60] sm:$0xff] %vm382, %v2256
        %2273 = vst.msk [vmem:[%s285 + $0x68] sm:$0xff] %vm382, %v2257
        %2274 = vst.msk [vmem:[%s285 + $0x70] sm:$0xff] %vm382, %v2258
        %2275 = vst.msk [vmem:[%s285 + $0x78] sm:$0xff] %vm382, %v2259
        %s2276 = sand.u32 %s195, 1
        %s2277 = scalar_lea.sflag [#allocation3], %s2276
        %s2278 = sand.u32 %s195, 1
        %s2279 = smul.addr %s2278, 128
        %s2280 = scalar_lea.vmem [#allocation2], %s2279
        // Predicated region
        $region49: #{tpu_custom_call.1} parent=47 // pred_check
          %p2281 = pneg %p205
        $region50: #{tpu_custom_call.1} parent=47 // pred_check_branch
          %2283 = sbr.rel (%p2281) target = $region52
        $region51: #{tpu_custom_call.1} parent=47 // pred_region
          %s2284 = smul.u32 8, %s26
          %s2286 = ssub.s32 2048, 2048
          %2287 = vsyncadd %s2277, %s2286
          %s2288 = smul.addr %s2284, 2
          %s2289 = smul.addr %s25, 32
          %s2290 = sadd.s32 %s2288, %s2289
          %s2291 = smul.addr %s2290, 128
          %s2292 = scalar_lea.hbm %s7, %s2291
          %s2293 = sshll.u32 %s2280, 4
          %s2294 = int_to_ptr.vmem [resolvable:$true] %s2293
          %2299 = dma.vmem_to_hbm [thread:$0]  %s2294, 2048, %s2292, %s2277, 128, 128, 8
        $region52: #{tpu_custom_call.1} parent=47 // pred_fallthru
          _
      $region48: #{tpu_custom_call.1} parent=5 // pred_fallthru
        _
      %p2300 = scmp.le.s32.totalorder 2, %s16
      // Predicated region
      $region53: #{tpu_custom_call.1} parent=5 // pred_check
        %p2301 = pneg %p2300
      $region54: #{tpu_custom_call.1} parent=5 // pred_check_branch
        %2303 = sbr.rel (%p2301) target = $region56
      $region55: #{tpu_custom_call.1} parent=5 // pred_region
        %s2304 = ssub.s32 %s16, 2
        // Predicated region
        $region57: #{tpu_custom_call.1} parent=55 // pred_check
          %p2305 = pneg %p211
        $region58: #{tpu_custom_call.1} parent=55 // pred_check_branch
          %2307 = sbr.rel (%p2305) target = $region60
        $region59: #{tpu_custom_call.1} parent=55 // pred_region
          %s2308 = sand.u32 %s196, 1
          %s2309 = scalar_lea.sflag [#allocation3], %s2308
          %s2310 = sand.u32 %s196, 1
          %s2311 = smul.addr %s2310, 128
          %s2312 = scalar_lea.vmem [#allocation2], %s2311
          %2313 = dma.done %s2309, 2048
        $region60: #{tpu_custom_call.1} parent=55 // pred_fallthru
          _
      $region56: #{tpu_custom_call.1} parent=5 // pred_fallthru
        _
    $region6: #{tpu_custom_call.1} parent=1 // loop_footer
      %s20 = sadd.s32 1, %s16
    $region7: #{tpu_custom_call.1} parent=1 // loop_footer_branch
      %15 = sbr.rel target = $region3
    $region8: #{tpu_custom_call.1} parent=1 // loop_exit
      _
    %2314 = vsyncpa [#allocation3], 1
    %s2315 = scalar_lea.sflag [#allocation3], 1
    %2316 = vsyncpa %s2315, 1

</llo_original>
